<compile_context>
chip_gen: v5e
topology: v5e:2x2
jax: 0.10.0
libtpu: 0.0.40
codegen_flags: <defaults>
</compile_context>

<pallas_src>
import math

import jax
import jax.numpy as jnp
from jax.experimental import pallas as pl
from jax.experimental.pallas import tpu as pltpu

HIDDEN = 100   # nn.Linear(1, 100)
LANES = 128    # TPU lane width


def _diffusion_kernel(w1_ref, b1_ref, w2_ref, b2_ref, x_ref, o_ref):
    """Fused fc1 -> ReLU -> fc2 -> sigmoid on one (rows, 128) lane-dense batch tile.

    w1_ref / b1_ref / w2_ref : SMEM (HIDDEN,) float32 scalars
    b2_ref                   : SMEM (1,)      float32
    x_ref / o_ref            : VMEM (rows, 128) float32 tiles (batch on sublanes+lanes)
    """
    x = x_ref[...]                                   # (rows, 128)
    acc = jnp.zeros_like(x) + b2_ref[0]              # start from fc2 bias
    # Static unroll over hidden units; only `acc` is loop-carried, so register
    # pressure stays at a few vreg groups regardless of hidden size.
    for j in range(HIDDEN):
        h = jnp.maximum(x * w1_ref[j] + b1_ref[j], 0.0)   # fc1 + ReLU (VPU)
        acc = acc + h * w2_ref[j]                          # fc2 accumulate (VPU)
    o_ref[...] = jax.nn.sigmoid(acc).astype(o_ref.dtype)   # EUP logistic


def diffusion_forward(t, x, w1, b1, w2, b2, *, rows_per_tile=256):
    """Pallas version of Diffusion.forward(t, x).  `t` is unused (matches PyTorch).

    x  : any shape with x.size == batch (e.g. (B, 1)); treated elementwise.
    w1 : (HIDDEN,)   fc1 weight (PyTorch fc1.weight[:, 0])
    b1 : (HIDDEN,)   fc1 bias
    w2 : (HIDDEN,)   fc2 weight (PyTorch fc2.weight[0, :])
    b2 : (1,)        fc2 bias
    """
    del t
    assert rows_per_tile % 8 == 0, "rows_per_tile must be a multiple of 8"

    orig_shape = x.shape
    xf = jnp.reshape(x, (-1,)).astype(jnp.float32)
    B = xf.shape[0]

    # Lane-dense padding: batch -> (rows_total, 128), rows tiled in blocks of rpt.
    rows_needed = pl.cdiv(B, LANES)
    rpt = min(rows_per_tile, ((rows_needed + 7) // 8) * 8)   # multiple of 8
    rows_total = ((rows_needed + rpt - 1) // rpt) * rpt
    b_pad = rows_total * LANES
    grid = (rows_total // rpt,)

    xp = jnp.pad(xf, (0, b_pad - B)).reshape(rows_total, LANES)

    out = pl.pallas_call(
        _diffusion_kernel,
        out_shape=jax.ShapeDtypeStruct((rows_total, LANES), jnp.float32),
        grid_spec=pltpu.PrefetchScalarGridSpec(
            num_scalar_prefetch=0,
            grid=grid,
            in_specs=[
                pl.BlockSpec(memory_space=pltpu.MemorySpace.SMEM),   # w1
                pl.BlockSpec(memory_space=pltpu.MemorySpace.SMEM),   # b1
                pl.BlockSpec(memory_space=pltpu.MemorySpace.SMEM),   # w2
                pl.BlockSpec(memory_space=pltpu.MemorySpace.SMEM),   # b2
                pl.BlockSpec((rpt, LANES), lambda i: (i, 0)),        # x tile (streamed)
            ],
            out_specs=pl.BlockSpec((rpt, LANES), lambda i: (i, 0)),
        ),
        compiler_params=pltpu.CompilerParams(
            dimension_semantics=("parallel",),   # batch tiles split across TCs (v7x)
        ),
    )(
        w1.astype(jnp.float32),
        b1.astype(jnp.float32),
        w2.astype(jnp.float32),
        b2.astype(jnp.float32),
        xp,
    )

    return out.reshape(-1)[:B].reshape(orig_shape)


def init_params(key):
    """Deterministic init mimicking nn.Linear defaults (uniform +/- 1/sqrt(fan_in))."""
    k1, k2, k3, k4 = jax.random.split(key, 4)
    bound1 = 1.0 / math.sqrt(1.0)       # fc1 fan_in = 1
    bound2 = 1.0 / math.sqrt(HIDDEN)    # fc2 fan_in = 100
    w1 = jax.random.uniform(k1, (HIDDEN,), jnp.float32, -bound1, bound1)
    b1 = jax.random.uniform(k2, (HIDDEN,), jnp.float32, -bound1, bound1)
    w2 = jax.random.uniform(k3, (HIDDEN,), jnp.float32, -bound2, bound2)
    b2 = jax.random.uniform(k4, (1,), jnp.float32, -bound2, bound2)
    return w1, b1, w2, b2


def reference_forward(x, w1, b1, w2, b2):
    """Pure-JAX reference of the PyTorch forward."""
    h = jnp.maximum(x @ w1[None, :] + b1[None, :], 0.0)   # (B,1)@(1,H) + (1,H)
    y = h @ w2[:, None] + b2                               # (B,H)@(H,1) + (1,)
    return jax.nn.sigmoid(y)


if __name__ == "__main__":
    key = jax.random.PRNGKey(0)
    kx1, kx2, kp = jax.random.split(key, 3)
    w1, b1, w2, b2 = init_params(kp)
    t = jnp.float32(0.0)   # unused by the module's forward

    # Case 1: non-multiple-of-128 batch (exercises the padding path), default tile.
    B1 = 300
    x1 = jax.random.normal(kx1, (B1, 1), jnp.float32)
    out1 = jax.block_until_ready(diffusion_forward(t, x1, w1, b1, w2, b2))
    ref1 = reference_forward(x1, w1, b1, w2, b2)
    assert out1.shape == (B1, 1)
    assert jnp.allclose(out1, ref1, atol=1e-5, rtol=1e-5), "mismatch vs reference (case 1)"

    # Case 2: small rows_per_tile to exercise a multi-step grid.
    B2 = 2000
    x2 = jax.random.normal(kx2, (B2, 1), jnp.float32)
    out2 = jax.block_until_ready(
        diffusion_forward(t, x2, w1, b1, w2, b2, rows_per_tile=8)
    )
    ref2 = reference_forward(x2, w1, b1, w2, b2)
    assert out2.shape == (B2, 1)
    assert jnp.allclose(out2, ref2, atol=1e-5, rtol=1e-5), "mismatch vs reference (case 2)"

    print("KERNEL_OK")
</pallas_src>

<mosaic_0001>
module attributes {stable_mosaic.version = 11 : i64} {
  func.func @_diffusion_kernel(%arg0: i32, %arg1: memref<100xf32, #tpu.memory_space<smem>>, %arg2: memref<100xf32, #tpu.memory_space<smem>>, %arg3: memref<100xf32, #tpu.memory_space<smem>>, %arg4: memref<1xf32, #tpu.memory_space<smem>>, %arg5: memref<8x128xf32, #tpu.memory_space<vmem>>, %arg6: memref<8x128xf32, #tpu.memory_space<vmem>>) attributes {dimension_semantics = [#tpu.dimension_semantics<parallel>], iteration_bounds = array<i64: 1>, scalar_prefetch = 0 : i64, scratch_operands = 0 : i64, tpu.core_type = #tpu.core_type<tc>, window_params = [{transform_indices = @transform_0, window_bounds = array<i64: 100>}, {transform_indices = @transform_1, window_bounds = array<i64: 100>}, {transform_indices = @transform_2, window_bounds = array<i64: 100>}, {transform_indices = @transform_3, window_bounds = array<i64: 1>}, {transform_indices = @transform_4, window_bounds = array<i64: 8, 128>}, {transform_indices = @transform_5, window_bounds = array<i64: 8, 128>}]} {
    %c0 = arith.constant 0 : index
    %c0_0 = arith.constant 0 : index
    %0 = vector.load %arg5[%c0, %c0_0] : memref<8x128xf32, #tpu.memory_space<vmem>>, vector<8x128xf32>
    %cst = arith.constant 0.000000e+00 : f32
    %1 = vector.broadcast %cst : f32 to vector<8x128xf32>
    %c0_1 = arith.constant 0 : index
    %2 = memref.load %arg4[%c0_1] : memref<1xf32, #tpu.memory_space<smem>>
    %3 = vector.broadcast %2 : f32 to vector<8x128xf32>
    %4 = arith.addf %1, %3 : vector<8x128xf32>
    %c0_2 = arith.constant 0 : index
    %5 = memref.load %arg1[%c0_2] : memref<100xf32, #tpu.memory_space<smem>>
    %6 = vector.broadcast %5 : f32 to vector<8x128xf32>
    %7 = arith.mulf %0, %6 : vector<8x128xf32>
    %c0_3 = arith.constant 0 : index
    %8 = memref.load %arg2[%c0_3] : memref<100xf32, #tpu.memory_space<smem>>
    %9 = vector.broadcast %8 : f32 to vector<8x128xf32>
    %10 = arith.addf %7, %9 : vector<8x128xf32>
    %cst_4 = arith.constant 0.000000e+00 : f32
    %11 = vector.broadcast %cst_4 : f32 to vector<8x128xf32>
    %12 = arith.maximumf %10, %11 : vector<8x128xf32>
    %c0_5 = arith.constant 0 : index
    %13 = memref.load %arg3[%c0_5] : memref<100xf32, #tpu.memory_space<smem>>
    %14 = vector.broadcast %13 : f32 to vector<8x128xf32>
    %15 = arith.mulf %12, %14 : vector<8x128xf32>
    %16 = arith.addf %4, %15 : vector<8x128xf32>
    %c1 = arith.constant 1 : index
    %17 = memref.load %arg1[%c1] : memref<100xf32, #tpu.memory_space<smem>>
    %18 = vector.broadcast %17 : f32 to vector<8x128xf32>
    %19 = arith.mulf %0, %18 : vector<8x128xf32>
    %c1_6 = arith.constant 1 : index
    %20 = memref.load %arg2[%c1_6] : memref<100xf32, #tpu.memory_space<smem>>
    %21 = vector.broadcast %20 : f32 to vector<8x128xf32>
    %22 = arith.addf %19, %21 : vector<8x128xf32>
    %cst_7 = arith.constant 0.000000e+00 : f32
    %23 = vector.broadcast %cst_7 : f32 to vector<8x128xf32>
    %24 = arith.maximumf %22, %23 : vector<8x128xf32>
    %c1_8 = arith.constant 1 : index
    %25 = memref.load %arg3[%c1_8] : memref<100xf32, #tpu.memory_space<smem>>
    %26 = vector.broadcast %25 : f32 to vector<8x128xf32>
    %27 = arith.mulf %24, %26 : vector<8x128xf32>
    %28 = arith.addf %16, %27 : vector<8x128xf32>
    %c2 = arith.constant 2 : index
    %29 = memref.load %arg1[%c2] : memref<100xf32, #tpu.memory_space<smem>>
    %30 = vector.broadcast %29 : f32 to vector<8x128xf32>
    %31 = arith.mulf %0, %30 : vector<8x128xf32>
    %c2_9 = arith.constant 2 : index
    %32 = memref.load %arg2[%c2_9] : memref<100xf32, #tpu.memory_space<smem>>
    %33 = vector.broadcast %32 : f32 to vector<8x128xf32>
    %34 = arith.addf %31, %33 : vector<8x128xf32>
    %cst_10 = arith.constant 0.000000e+00 : f32
    %35 = vector.broadcast %cst_10 : f32 to vector<8x128xf32>
    %36 = arith.maximumf %34, %35 : vector<8x128xf32>
    %c2_11 = arith.constant 2 : index
    %37 = memref.load %arg3[%c2_11] : memref<100xf32, #tpu.memory_space<smem>>
    %38 = vector.broadcast %37 : f32 to vector<8x128xf32>
    %39 = arith.mulf %36, %38 : vector<8x128xf32>
    %40 = arith.addf %28, %39 : vector<8x128xf32>
    %c3 = arith.constant 3 : index
    %41 = memref.load %arg1[%c3] : memref<100xf32, #tpu.memory_space<smem>>
    %42 = vector.broadcast %41 : f32 to vector<8x128xf32>
    %43 = arith.mulf %0, %42 : vector<8x128xf32>
    %c3_12 = arith.constant 3 : index
    %44 = memref.load %arg2[%c3_12] : memref<100xf32, #tpu.memory_space<smem>>
    %45 = vector.broadcast %44 : f32 to vector<8x128xf32>
    %46 = arith.addf %43, %45 : vector<8x128xf32>
    %cst_13 = arith.constant 0.000000e+00 : f32
    %47 = vector.broadcast %cst_13 : f32 to vector<8x128xf32>
    %48 = arith.maximumf %46, %47 : vector<8x128xf32>
    %c3_14 = arith.constant 3 : index
    %49 = memref.load %arg3[%c3_14] : memref<100xf32, #tpu.memory_space<smem>>
    %50 = vector.broadcast %49 : f32 to vector<8x128xf32>
    %51 = arith.mulf %48, %50 : vector<8x128xf32>
    %52 = arith.addf %40, %51 : vector<8x128xf32>
    %c4 = arith.constant 4 : index
    %53 = memref.load %arg1[%c4] : memref<100xf32, #tpu.memory_space<smem>>
    %54 = vector.broadcast %53 : f32 to vector<8x128xf32>
    %55 = arith.mulf %0, %54 : vector<8x128xf32>
    %c4_15 = arith.constant 4 : index
    %56 = memref.load %arg2[%c4_15] : memref<100xf32, #tpu.memory_space<smem>>
    %57 = vector.broadcast %56 : f32 to vector<8x128xf32>
    %58 = arith.addf %55, %57 : vector<8x128xf32>
    %cst_16 = arith.constant 0.000000e+00 : f32
    %59 = vector.broadcast %cst_16 : f32 to vector<8x128xf32>
    %60 = arith.maximumf %58, %59 : vector<8x128xf32>
    %c4_17 = arith.constant 4 : index
    %61 = memref.load %arg3[%c4_17] : memref<100xf32, #tpu.memory_space<smem>>
    %62 = vector.broadcast %61 : f32 to vector<8x128xf32>
    %63 = arith.mulf %60, %62 : vector<8x128xf32>
    %64 = arith.addf %52, %63 : vector<8x128xf32>
    %c5 = arith.constant 5 : index
    %65 = memref.load %arg1[%c5] : memref<100xf32, #tpu.memory_space<smem>>
    %66 = vector.broadcast %65 : f32 to vector<8x128xf32>
    %67 = arith.mulf %0, %66 : vector<8x128xf32>
    %c5_18 = arith.constant 5 : index
    %68 = memref.load %arg2[%c5_18] : memref<100xf32, #tpu.memory_space<smem>>
    %69 = vector.broadcast %68 : f32 to vector<8x128xf32>
    %70 = arith.addf %67, %69 : vector<8x128xf32>
    %cst_19 = arith.constant 0.000000e+00 : f32
    %71 = vector.broadcast %cst_19 : f32 to vector<8x128xf32>
    %72 = arith.maximumf %70, %71 : vector<8x128xf32>
    %c5_20 = arith.constant 5 : index
    %73 = memref.load %arg3[%c5_20] : memref<100xf32, #tpu.memory_space<smem>>
    %74 = vector.broadcast %73 : f32 to vector<8x128xf32>
    %75 = arith.mulf %72, %74 : vector<8x128xf32>
    %76 = arith.addf %64, %75 : vector<8x128xf32>
    %c6 = arith.constant 6 : index
    %77 = memref.load %arg1[%c6] : memref<100xf32, #tpu.memory_space<smem>>
    %78 = vector.broadcast %77 : f32 to vector<8x128xf32>
    %79 = arith.mulf %0, %78 : vector<8x128xf32>
    %c6_21 = arith.constant 6 : index
    %80 = memref.load %arg2[%c6_21] : memref<100xf32, #tpu.memory_space<smem>>
    %81 = vector.broadcast %80 : f32 to vector<8x128xf32>
    %82 = arith.addf %79, %81 : vector<8x128xf32>
    %cst_22 = arith.constant 0.000000e+00 : f32
    %83 = vector.broadcast %cst_22 : f32 to vector<8x128xf32>
    %84 = arith.maximumf %82, %83 : vector<8x128xf32>
    %c6_23 = arith.constant 6 : index
    %85 = memref.load %arg3[%c6_23] : memref<100xf32, #tpu.memory_space<smem>>
    %86 = vector.broadcast %85 : f32 to vector<8x128xf32>
    %87 = arith.mulf %84, %86 : vector<8x128xf32>
    %88 = arith.addf %76, %87 : vector<8x128xf32>
    %c7 = arith.constant 7 : index
    %89 = memref.load %arg1[%c7] : memref<100xf32, #tpu.memory_space<smem>>
    %90 = vector.broadcast %89 : f32 to vector<8x128xf32>
    %91 = arith.mulf %0, %90 : vector<8x128xf32>
    %c7_24 = arith.constant 7 : index
    %92 = memref.load %arg2[%c7_24] : memref<100xf32, #tpu.memory_space<smem>>
    %93 = vector.broadcast %92 : f32 to vector<8x128xf32>
    %94 = arith.addf %91, %93 : vector<8x128xf32>
    %cst_25 = arith.constant 0.000000e+00 : f32
    %95 = vector.broadcast %cst_25 : f32 to vector<8x128xf32>
    %96 = arith.maximumf %94, %95 : vector<8x128xf32>
    %c7_26 = arith.constant 7 : index
    %97 = memref.load %arg3[%c7_26] : memref<100xf32, #tpu.memory_space<smem>>
    %98 = vector.broadcast %97 : f32 to vector<8x128xf32>
    %99 = arith.mulf %96, %98 : vector<8x128xf32>
    %100 = arith.addf %88, %99 : vector<8x128xf32>
    %c8 = arith.constant 8 : index
    %101 = memref.load %arg1[%c8] : memref<100xf32, #tpu.memory_space<smem>>
    %102 = vector.broadcast %101 : f32 to vector<8x128xf32>
    %103 = arith.mulf %0, %102 : vector<8x128xf32>
    %c8_27 = arith.constant 8 : index
    %104 = memref.load %arg2[%c8_27] : memref<100xf32, #tpu.memory_space<smem>>
    %105 = vector.broadcast %104 : f32 to vector<8x128xf32>
    %106 = arith.addf %103, %105 : vector<8x128xf32>
    %cst_28 = arith.constant 0.000000e+00 : f32
    %107 = vector.broadcast %cst_28 : f32 to vector<8x128xf32>
    %108 = arith.maximumf %106, %107 : vector<8x128xf32>
    %c8_29 = arith.constant 8 : index
    %109 = memref.load %arg3[%c8_29] : memref<100xf32, #tpu.memory_space<smem>>
    %110 = vector.broadcast %109 : f32 to vector<8x128xf32>
    %111 = arith.mulf %108, %110 : vector<8x128xf32>
    %112 = arith.addf %100, %111 : vector<8x128xf32>
    %c9 = arith.constant 9 : index
    %113 = memref.load %arg1[%c9] : memref<100xf32, #tpu.memory_space<smem>>
    %114 = vector.broadcast %113 : f32 to vector<8x128xf32>
    %115 = arith.mulf %0, %114 : vector<8x128xf32>
    %c9_30 = arith.constant 9 : index
    %116 = memref.load %arg2[%c9_30] : memref<100xf32, #tpu.memory_space<smem>>
    %117 = vector.broadcast %116 : f32 to vector<8x128xf32>
    %118 = arith.addf %115, %117 : vector<8x128xf32>
    %cst_31 = arith.constant 0.000000e+00 : f32
    %119 = vector.broadcast %cst_31 : f32 to vector<8x128xf32>
    %120 = arith.maximumf %118, %119 : vector<8x128xf32>
    %c9_32 = arith.constant 9 : index
    %121 = memref.load %arg3[%c9_32] : memref<100xf32, #tpu.memory_space<smem>>
    %122 = vector.broadcast %121 : f32 to vector<8x128xf32>
    %123 = arith.mulf %120, %122 : vector<8x128xf32>
    %124 = arith.addf %112, %123 : vector<8x128xf32>
    %c10 = arith.constant 10 : index
    %125 = memref.load %arg1[%c10] : memref<100xf32, #tpu.memory_space<smem>>
    %126 = vector.broadcast %125 : f32 to vector<8x128xf32>
    %127 = arith.mulf %0, %126 : vector<8x128xf32>
    %c10_33 = arith.constant 10 : index
    %128 = memref.load %arg2[%c10_33] : memref<100xf32, #tpu.memory_space<smem>>
    %129 = vector.broadcast %128 : f32 to vector<8x128xf32>
    %130 = arith.addf %127, %129 : vector<8x128xf32>
    %cst_34 = arith.constant 0.000000e+00 : f32
    %131 = vector.broadcast %cst_34 : f32 to vector<8x128xf32>
    %132 = arith.maximumf %130, %131 : vector<8x128xf32>
    %c10_35 = arith.constant 10 : index
    %133 = memref.load %arg3[%c10_35] : memref<100xf32, #tpu.memory_space<smem>>
    %134 = vector.broadcast %133 : f32 to vector<8x128xf32>
    %135 = arith.mulf %132, %134 : vector<8x128xf32>
    %136 = arith.addf %124, %135 : vector<8x128xf32>
    %c11 = arith.constant 11 : index
    %137 = memref.load %arg1[%c11] : memref<100xf32, #tpu.memory_space<smem>>
    %138 = vector.broadcast %137 : f32 to vector<8x128xf32>
    %139 = arith.mulf %0, %138 : vector<8x128xf32>
    %c11_36 = arith.constant 11 : index
    %140 = memref.load %arg2[%c11_36] : memref<100xf32, #tpu.memory_space<smem>>
    %141 = vector.broadcast %140 : f32 to vector<8x128xf32>
    %142 = arith.addf %139, %141 : vector<8x128xf32>
    %cst_37 = arith.constant 0.000000e+00 : f32
    %143 = vector.broadcast %cst_37 : f32 to vector<8x128xf32>
    %144 = arith.maximumf %142, %143 : vector<8x128xf32>
    %c11_38 = arith.constant 11 : index
    %145 = memref.load %arg3[%c11_38] : memref<100xf32, #tpu.memory_space<smem>>
    %146 = vector.broadcast %145 : f32 to vector<8x128xf32>
    %147 = arith.mulf %144, %146 : vector<8x128xf32>
    %148 = arith.addf %136, %147 : vector<8x128xf32>
    %c12 = arith.constant 12 : index
    %149 = memref.load %arg1[%c12] : memref<100xf32, #tpu.memory_space<smem>>
    %150 = vector.broadcast %149 : f32 to vector<8x128xf32>
    %151 = arith.mulf %0, %150 : vector<8x128xf32>
    %c12_39 = arith.constant 12 : index
    %152 = memref.load %arg2[%c12_39] : memref<100xf32, #tpu.memory_space<smem>>
    %153 = vector.broadcast %152 : f32 to vector<8x128xf32>
    %154 = arith.addf %151, %153 : vector<8x128xf32>
    %cst_40 = arith.constant 0.000000e+00 : f32
    %155 = vector.broadcast %cst_40 : f32 to vector<8x128xf32>
    %156 = arith.maximumf %154, %155 : vector<8x128xf32>
    %c12_41 = arith.constant 12 : index
    %157 = memref.load %arg3[%c12_41] : memref<100xf32, #tpu.memory_space<smem>>
    %158 = vector.broadcast %157 : f32 to vector<8x128xf32>
    %159 = arith.mulf %156, %158 : vector<8x128xf32>
    %160 = arith.addf %148, %159 : vector<8x128xf32>
    %c13 = arith.constant 13 : index
    %161 = memref.load %arg1[%c13] : memref<100xf32, #tpu.memory_space<smem>>
    %162 = vector.broadcast %161 : f32 to vector<8x128xf32>
    %163 = arith.mulf %0, %162 : vector<8x128xf32>
    %c13_42 = arith.constant 13 : index
    %164 = memref.load %arg2[%c13_42] : memref<100xf32, #tpu.memory_space<smem>>
    %165 = vector.broadcast %164 : f32 to vector<8x128xf32>
    %166 = arith.addf %163, %165 : vector<8x128xf32>
    %cst_43 = arith.constant 0.000000e+00 : f32
    %167 = vector.broadcast %cst_43 : f32 to vector<8x128xf32>
    %168 = arith.maximumf %166, %167 : vector<8x128xf32>
    %c13_44 = arith.constant 13 : index
    %169 = memref.load %arg3[%c13_44] : memref<100xf32, #tpu.memory_space<smem>>
    %170 = vector.broadcast %169 : f32 to vector<8x128xf32>
    %171 = arith.mulf %168, %170 : vector<8x128xf32>
    %172 = arith.addf %160, %171 : vector<8x128xf32>
    %c14 = arith.constant 14 : index
    %173 = memref.load %arg1[%c14] : memref<100xf32, #tpu.memory_space<smem>>
    %174 = vector.broadcast %173 : f32 to vector<8x128xf32>
    %175 = arith.mulf %0, %174 : vector<8x128xf32>
    %c14_45 = arith.constant 14 : index
    %176 = memref.load %arg2[%c14_45] : memref<100xf32, #tpu.memory_space<smem>>
    %177 = vector.broadcast %176 : f32 to vector<8x128xf32>
    %178 = arith.addf %175, %177 : vector<8x128xf32>
    %cst_46 = arith.constant 0.000000e+00 : f32
    %179 = vector.broadcast %cst_46 : f32 to vector<8x128xf32>
    %180 = arith.maximumf %178, %179 : vector<8x128xf32>
    %c14_47 = arith.constant 14 : index
    %181 = memref.load %arg3[%c14_47] : memref<100xf32, #tpu.memory_space<smem>>
    %182 = vector.broadcast %181 : f32 to vector<8x128xf32>
    %183 = arith.mulf %180, %182 : vector<8x128xf32>
    %184 = arith.addf %172, %183 : vector<8x128xf32>
    %c15 = arith.constant 15 : index
    %185 = memref.load %arg1[%c15] : memref<100xf32, #tpu.memory_space<smem>>
    %186 = vector.broadcast %185 : f32 to vector<8x128xf32>
    %187 = arith.mulf %0, %186 : vector<8x128xf32>
    %c15_48 = arith.constant 15 : index
    %188 = memref.load %arg2[%c15_48] : memref<100xf32, #tpu.memory_space<smem>>
    %189 = vector.broadcast %188 : f32 to vector<8x128xf32>
    %190 = arith.addf %187, %189 : vector<8x128xf32>
    %cst_49 = arith.constant 0.000000e+00 : f32
    %191 = vector.broadcast %cst_49 : f32 to vector<8x128xf32>
    %192 = arith.maximumf %190, %191 : vector<8x128xf32>
    %c15_50 = arith.constant 15 : index
    %193 = memref.load %arg3[%c15_50] : memref<100xf32, #tpu.memory_space<smem>>
    %194 = vector.broadcast %193 : f32 to vector<8x128xf32>
    %195 = arith.mulf %192, %194 : vector<8x128xf32>
    %196 = arith.addf %184, %195 : vector<8x128xf32>
    %c16 = arith.constant 16 : index
    %197 = memref.load %arg1[%c16] : memref<100xf32, #tpu.memory_space<smem>>
    %198 = vector.broadcast %197 : f32 to vector<8x128xf32>
    %199 = arith.mulf %0, %198 : vector<8x128xf32>
    %c16_51 = arith.constant 16 : index
    %200 = memref.load %arg2[%c16_51] : memref<100xf32, #tpu.memory_space<smem>>
    %201 = vector.broadcast %200 : f32 to vector<8x128xf32>
    %202 = arith.addf %199, %201 : vector<8x128xf32>
    %cst_52 = arith.constant 0.000000e+00 : f32
    %203 = vector.broadcast %cst_52 : f32 to vector<8x128xf32>
    %204 = arith.maximumf %202, %203 : vector<8x128xf32>
    %c16_53 = arith.constant 16 : index
    %205 = memref.load %arg3[%c16_53] : memref<100xf32, #tpu.memory_space<smem>>
    %206 = vector.broadcast %205 : f32 to vector<8x128xf32>
    %207 = arith.mulf %204, %206 : vector<8x128xf32>
    %208 = arith.addf %196, %207 : vector<8x128xf32>
    %c17 = arith.constant 17 : index
    %209 = memref.load %arg1[%c17] : memref<100xf32, #tpu.memory_space<smem>>
    %210 = vector.broadcast %209 : f32 to vector<8x128xf32>
    %211 = arith.mulf %0, %210 : vector<8x128xf32>
    %c17_54 = arith.constant 17 : index
    %212 = memref.load %arg2[%c17_54] : memref<100xf32, #tpu.memory_space<smem>>
    %213 = vector.broadcast %212 : f32 to vector<8x128xf32>
    %214 = arith.addf %211, %213 : vector<8x128xf32>
    %cst_55 = arith.constant 0.000000e+00 : f32
    %215 = vector.broadcast %cst_55 : f32 to vector<8x128xf32>
    %216 = arith.maximumf %214, %215 : vector<8x128xf32>
    %c17_56 = arith.constant 17 : index
    %217 = memref.load %arg3[%c17_56] : memref<100xf32, #tpu.memory_space<smem>>
    %218 = vector.broadcast %217 : f32 to vector<8x128xf32>
    %219 = arith.mulf %216, %218 : vector<8x128xf32>
    %220 = arith.addf %208, %219 : vector<8x128xf32>
    %c18 = arith.constant 18 : index
    %221 = memref.load %arg1[%c18] : memref<100xf32, #tpu.memory_space<smem>>
    %222 = vector.broadcast %221 : f32 to vector<8x128xf32>
    %223 = arith.mulf %0, %222 : vector<8x128xf32>
    %c18_57 = arith.constant 18 : index
    %224 = memref.load %arg2[%c18_57] : memref<100xf32, #tpu.memory_space<smem>>
    %225 = vector.broadcast %224 : f32 to vector<8x128xf32>
    %226 = arith.addf %223, %225 : vector<8x128xf32>
    %cst_58 = arith.constant 0.000000e+00 : f32
    %227 = vector.broadcast %cst_58 : f32 to vector<8x128xf32>
    %228 = arith.maximumf %226, %227 : vector<8x128xf32>
    %c18_59 = arith.constant 18 : index
    %229 = memref.load %arg3[%c18_59] : memref<100xf32, #tpu.memory_space<smem>>
    %230 = vector.broadcast %229 : f32 to vector<8x128xf32>
    %231 = arith.mulf %228, %230 : vector<8x128xf32>
    %232 = arith.addf %220, %231 : vector<8x128xf32>
    %c19 = arith.constant 19 : index
    %233 = memref.load %arg1[%c19] : memref<100xf32, #tpu.memory_space<smem>>
    %234 = vector.broadcast %233 : f32 to vector<8x128xf32>
    %235 = arith.mulf %0, %234 : vector<8x128xf32>
    %c19_60 = arith.constant 19 : index
    %236 = memref.load %arg2[%c19_60] : memref<100xf32, #tpu.memory_space<smem>>
    %237 = vector.broadcast %236 : f32 to vector<8x128xf32>
    %238 = arith.addf %235, %237 : vector<8x128xf32>
    %cst_61 = arith.constant 0.000000e+00 : f32
    %239 = vector.broadcast %cst_61 : f32 to vector<8x128xf32>
    %240 = arith.maximumf %238, %239 : vector<8x128xf32>
    %c19_62 = arith.constant 19 : index
    %241 = memref.load %arg3[%c19_62] : memref<100xf32, #tpu.memory_space<smem>>
    %242 = vector.broadcast %241 : f32 to vector<8x128xf32>
    %243 = arith.mulf %240, %242 : vector<8x128xf32>
    %244 = arith.addf %232, %243 : vector<8x128xf32>
    %c20 = arith.constant 20 : index
    %245 = memref.load %arg1[%c20] : memref<100xf32, #tpu.memory_space<smem>>
    %246 = vector.broadcast %245 : f32 to vector<8x128xf32>
    %247 = arith.mulf %0, %246 : vector<8x128xf32>
    %c20_63 = arith.constant 20 : index
    %248 = memref.load %arg2[%c20_63] : memref<100xf32, #tpu.memory_space<smem>>
    %249 = vector.broadcast %248 : f32 to vector<8x128xf32>
    %250 = arith.addf %247, %249 : vector<8x128xf32>
    %cst_64 = arith.constant 0.000000e+00 : f32
    %251 = vector.broadcast %cst_64 : f32 to vector<8x128xf32>
    %252 = arith.maximumf %250, %251 : vector<8x128xf32>
    %c20_65 = arith.constant 20 : index
    %253 = memref.load %arg3[%c20_65] : memref<100xf32, #tpu.memory_space<smem>>
    %254 = vector.broadcast %253 : f32 to vector<8x128xf32>
    %255 = arith.mulf %252, %254 : vector<8x128xf32>
    %256 = arith.addf %244, %255 : vector<8x128xf32>
    %c21 = arith.constant 21 : index
    %257 = memref.load %arg1[%c21] : memref<100xf32, #tpu.memory_space<smem>>
    %258 = vector.broadcast %257 : f32 to vector<8x128xf32>
    %259 = arith.mulf %0, %258 : vector<8x128xf32>
    %c21_66 = arith.constant 21 : index
    %260 = memref.load %arg2[%c21_66] : memref<100xf32, #tpu.memory_space<smem>>
    %261 = vector.broadcast %260 : f32 to vector<8x128xf32>
    %262 = arith.addf %259, %261 : vector<8x128xf32>
    %cst_67 = arith.constant 0.000000e+00 : f32
    %263 = vector.broadcast %cst_67 : f32 to vector<8x128xf32>
    %264 = arith.maximumf %262, %263 : vector<8x128xf32>
    %c21_68 = arith.constant 21 : index
    %265 = memref.load %arg3[%c21_68] : memref<100xf32, #tpu.memory_space<smem>>
    %266 = vector.broadcast %265 : f32 to vector<8x128xf32>
    %267 = arith.mulf %264, %266 : vector<8x128xf32>
    %268 = arith.addf %256, %267 : vector<8x128xf32>
    %c22 = arith.constant 22 : index
    %269 = memref.load %arg1[%c22] : memref<100xf32, #tpu.memory_space<smem>>
    %270 = vector.broadcast %269 : f32 to vector<8x128xf32>
    %271 = arith.mulf %0, %270 : vector<8x128xf32>
    %c22_69 = arith.constant 22 : index
    %272 = memref.load %arg2[%c22_69] : memref<100xf32, #tpu.memory_space<smem>>
    %273 = vector.broadcast %272 : f32 to vector<8x128xf32>
    %274 = arith.addf %271, %273 : vector<8x128xf32>
    %cst_70 = arith.constant 0.000000e+00 : f32
    %275 = vector.broadcast %cst_70 : f32 to vector<8x128xf32>
    %276 = arith.maximumf %274, %275 : vector<8x128xf32>
    %c22_71 = arith.constant 22 : index
    %277 = memref.load %arg3[%c22_71] : memref<100xf32, #tpu.memory_space<smem>>
    %278 = vector.broadcast %277 : f32 to vector<8x128xf32>
    %279 = arith.mulf %276, %278 : vector<8x128xf32>
    %280 = arith.addf %268, %279 : vector<8x128xf32>
    %c23 = arith.constant 23 : index
    %281 = memref.load %arg1[%c23] : memref<100xf32, #tpu.memory_space<smem>>
    %282 = vector.broadcast %281 : f32 to vector<8x128xf32>
    %283 = arith.mulf %0, %282 : vector<8x128xf32>
    %c23_72 = arith.constant 23 : index
    %284 = memref.load %arg2[%c23_72] : memref<100xf32, #tpu.memory_space<smem>>
    %285 = vector.broadcast %284 : f32 to vector<8x128xf32>
    %286 = arith.addf %283, %285 : vector<8x128xf32>
    %cst_73 = arith.constant 0.000000e+00 : f32
    %287 = vector.broadcast %cst_73 : f32 to vector<8x128xf32>
    %288 = arith.maximumf %286, %287 : vector<8x128xf32>
    %c23_74 = arith.constant 23 : index
    %289 = memref.load %arg3[%c23_74] : memref<100xf32, #tpu.memory_space<smem>>
    %290 = vector.broadcast %289 : f32 to vector<8x128xf32>
    %291 = arith.mulf %288, %290 : vector<8x128xf32>
    %292 = arith.addf %280, %291 : vector<8x128xf32>
    %c24 = arith.constant 24 : index
    %293 = memref.load %arg1[%c24] : memref<100xf32, #tpu.memory_space<smem>>
    %294 = vector.broadcast %293 : f32 to vector<8x128xf32>
    %295 = arith.mulf %0, %294 : vector<8x128xf32>
    %c24_75 = arith.constant 24 : index
    %296 = memref.load %arg2[%c24_75] : memref<100xf32, #tpu.memory_space<smem>>
    %297 = vector.broadcast %296 : f32 to vector<8x128xf32>
    %298 = arith.addf %295, %297 : vector<8x128xf32>
    %cst_76 = arith.constant 0.000000e+00 : f32
    %299 = vector.broadcast %cst_76 : f32 to vector<8x128xf32>
    %300 = arith.maximumf %298, %299 : vector<8x128xf32>
    %c24_77 = arith.constant 24 : index
    %301 = memref.load %arg3[%c24_77] : memref<100xf32, #tpu.memory_space<smem>>
    %302 = vector.broadcast %301 : f32 to vector<8x128xf32>
    %303 = arith.mulf %300, %302 : vector<8x128xf32>
    %304 = arith.addf %292, %303 : vector<8x128xf32>
    %c25 = arith.constant 25 : index
    %305 = memref.load %arg1[%c25] : memref<100xf32, #tpu.memory_space<smem>>
    %306 = vector.broadcast %305 : f32 to vector<8x128xf32>
    %307 = arith.mulf %0, %306 : vector<8x128xf32>
    %c25_78 = arith.constant 25 : index
    %308 = memref.load %arg2[%c25_78] : memref<100xf32, #tpu.memory_space<smem>>
    %309 = vector.broadcast %308 : f32 to vector<8x128xf32>
    %310 = arith.addf %307, %309 : vector<8x128xf32>
    %cst_79 = arith.constant 0.000000e+00 : f32
    %311 = vector.broadcast %cst_79 : f32 to vector<8x128xf32>
    %312 = arith.maximumf %310, %311 : vector<8x128xf32>
    %c25_80 = arith.constant 25 : index
    %313 = memref.load %arg3[%c25_80] : memref<100xf32, #tpu.memory_space<smem>>
    %314 = vector.broadcast %313 : f32 to vector<8x128xf32>
    %315 = arith.mulf %312, %314 : vector<8x128xf32>
    %316 = arith.addf %304, %315 : vector<8x128xf32>
    %c26 = arith.constant 26 : index
    %317 = memref.load %arg1[%c26] : memref<100xf32, #tpu.memory_space<smem>>
    %318 = vector.broadcast %317 : f32 to vector<8x128xf32>
    %319 = arith.mulf %0, %318 : vector<8x128xf32>
    %c26_81 = arith.constant 26 : index
    %320 = memref.load %arg2[%c26_81] : memref<100xf32, #tpu.memory_space<smem>>
    %321 = vector.broadcast %320 : f32 to vector<8x128xf32>
    %322 = arith.addf %319, %321 : vector<8x128xf32>
    %cst_82 = arith.constant 0.000000e+00 : f32
    %323 = vector.broadcast %cst_82 : f32 to vector<8x128xf32>
    %324 = arith.maximumf %322, %323 : vector<8x128xf32>
    %c26_83 = arith.constant 26 : index
    %325 = memref.load %arg3[%c26_83] : memref<100xf32, #tpu.memory_space<smem>>
    %326 = vector.broadcast %325 : f32 to vector<8x128xf32>
    %327 = arith.mulf %324, %326 : vector<8x128xf32>
    %328 = arith.addf %316, %327 : vector<8x128xf32>
    %c27 = arith.constant 27 : index
    %329 = memref.load %arg1[%c27] : memref<100xf32, #tpu.memory_space<smem>>
    %330 = vector.broadcast %329 : f32 to vector<8x128xf32>
    %331 = arith.mulf %0, %330 : vector<8x128xf32>
    %c27_84 = arith.constant 27 : index
    %332 = memref.load %arg2[%c27_84] : memref<100xf32, #tpu.memory_space<smem>>
    %333 = vector.broadcast %332 : f32 to vector<8x128xf32>
    %334 = arith.addf %331, %333 : vector<8x128xf32>
    %cst_85 = arith.constant 0.000000e+00 : f32
    %335 = vector.broadcast %cst_85 : f32 to vector<8x128xf32>
    %336 = arith.maximumf %334, %335 : vector<8x128xf32>
    %c27_86 = arith.constant 27 : index
    %337 = memref.load %arg3[%c27_86] : memref<100xf32, #tpu.memory_space<smem>>
    %338 = vector.broadcast %337 : f32 to vector<8x128xf32>
    %339 = arith.mulf %336, %338 : vector<8x128xf32>
    %340 = arith.addf %328, %339 : vector<8x128xf32>
    %c28 = arith.constant 28 : index
    %341 = memref.load %arg1[%c28] : memref<100xf32, #tpu.memory_space<smem>>
    %342 = vector.broadcast %341 : f32 to vector<8x128xf32>
    %343 = arith.mulf %0, %342 : vector<8x128xf32>
    %c28_87 = arith.constant 28 : index
    %344 = memref.load %arg2[%c28_87] : memref<100xf32, #tpu.memory_space<smem>>
    %345 = vector.broadcast %344 : f32 to vector<8x128xf32>
    %346 = arith.addf %343, %345 : vector<8x128xf32>
    %cst_88 = arith.constant 0.000000e+00 : f32
    %347 = vector.broadcast %cst_88 : f32 to vector<8x128xf32>
    %348 = arith.maximumf %346, %347 : vector<8x128xf32>
    %c28_89 = arith.constant 28 : index
    %349 = memref.load %arg3[%c28_89] : memref<100xf32, #tpu.memory_space<smem>>
    %350 = vector.broadcast %349 : f32 to vector<8x128xf32>
    %351 = arith.mulf %348, %350 : vector<8x128xf32>
    %352 = arith.addf %340, %351 : vector<8x128xf32>
    %c29 = arith.constant 29 : index
    %353 = memref.load %arg1[%c29] : memref<100xf32, #tpu.memory_space<smem>>
    %354 = vector.broadcast %353 : f32 to vector<8x128xf32>
    %355 = arith.mulf %0, %354 : vector<8x128xf32>
    %c29_90 = arith.constant 29 : index
    %356 = memref.load %arg2[%c29_90] : memref<100xf32, #tpu.memory_space<smem>>
    %357 = vector.broadcast %356 : f32 to vector<8x128xf32>
    %358 = arith.addf %355, %357 : vector<8x128xf32>
    %cst_91 = arith.constant 0.000000e+00 : f32
    %359 = vector.broadcast %cst_91 : f32 to vector<8x128xf32>
    %360 = arith.maximumf %358, %359 : vector<8x128xf32>
    %c29_92 = arith.constant 29 : index
    %361 = memref.load %arg3[%c29_92] : memref<100xf32, #tpu.memory_space<smem>>
    %362 = vector.broadcast %361 : f32 to vector<8x128xf32>
    %363 = arith.mulf %360, %362 : vector<8x128xf32>
    %364 = arith.addf %352, %363 : vector<8x128xf32>
    %c30 = arith.constant 30 : index
    %365 = memref.load %arg1[%c30] : memref<100xf32, #tpu.memory_space<smem>>
    %366 = vector.broadcast %365 : f32 to vector<8x128xf32>
    %367 = arith.mulf %0, %366 : vector<8x128xf32>
    %c30_93 = arith.constant 30 : index
    %368 = memref.load %arg2[%c30_93] : memref<100xf32, #tpu.memory_space<smem>>
    %369 = vector.broadcast %368 : f32 to vector<8x128xf32>
    %370 = arith.addf %367, %369 : vector<8x128xf32>
    %cst_94 = arith.constant 0.000000e+00 : f32
    %371 = vector.broadcast %cst_94 : f32 to vector<8x128xf32>
    %372 = arith.maximumf %370, %371 : vector<8x128xf32>
    %c30_95 = arith.constant 30 : index
    %373 = memref.load %arg3[%c30_95] : memref<100xf32, #tpu.memory_space<smem>>
    %374 = vector.broadcast %373 : f32 to vector<8x128xf32>
    %375 = arith.mulf %372, %374 : vector<8x128xf32>
    %376 = arith.addf %364, %375 : vector<8x128xf32>
    %c31 = arith.constant 31 : index
    %377 = memref.load %arg1[%c31] : memref<100xf32, #tpu.memory_space<smem>>
    %378 = vector.broadcast %377 : f32 to vector<8x128xf32>
    %379 = arith.mulf %0, %378 : vector<8x128xf32>
    %c31_96 = arith.constant 31 : index
    %380 = memref.load %arg2[%c31_96] : memref<100xf32, #tpu.memory_space<smem>>
    %381 = vector.broadcast %380 : f32 to vector<8x128xf32>
    %382 = arith.addf %379, %381 : vector<8x128xf32>
    %cst_97 = arith.constant 0.000000e+00 : f32
    %383 = vector.broadcast %cst_97 : f32 to vector<8x128xf32>
    %384 = arith.maximumf %382, %383 : vector<8x128xf32>
    %c31_98 = arith.constant 31 : index
    %385 = memref.load %arg3[%c31_98] : memref<100xf32, #tpu.memory_space<smem>>
    %386 = vector.broadcast %385 : f32 to vector<8x128xf32>
    %387 = arith.mulf %384, %386 : vector<8x128xf32>
    %388 = arith.addf %376, %387 : vector<8x128xf32>
    %c32 = arith.constant 32 : index
    %389 = memref.load %arg1[%c32] : memref<100xf32, #tpu.memory_space<smem>>
    %390 = vector.broadcast %389 : f32 to vector<8x128xf32>
    %391 = arith.mulf %0, %390 : vector<8x128xf32>
    %c32_99 = arith.constant 32 : index
    %392 = memref.load %arg2[%c32_99] : memref<100xf32, #tpu.memory_space<smem>>
    %393 = vector.broadcast %392 : f32 to vector<8x128xf32>
    %394 = arith.addf %391, %393 : vector<8x128xf32>
    %cst_100 = arith.constant 0.000000e+00 : f32
    %395 = vector.broadcast %cst_100 : f32 to vector<8x128xf32>
    %396 = arith.maximumf %394, %395 : vector<8x128xf32>
    %c32_101 = arith.constant 32 : index
    %397 = memref.load %arg3[%c32_101] : memref<100xf32, #tpu.memory_space<smem>>
    %398 = vector.broadcast %397 : f32 to vector<8x128xf32>
    %399 = arith.mulf %396, %398 : vector<8x128xf32>
    %400 = arith.addf %388, %399 : vector<8x128xf32>
    %c33 = arith.constant 33 : index
    %401 = memref.load %arg1[%c33] : memref<100xf32, #tpu.memory_space<smem>>
    %402 = vector.broadcast %401 : f32 to vector<8x128xf32>
    %403 = arith.mulf %0, %402 : vector<8x128xf32>
    %c33_102 = arith.constant 33 : index
    %404 = memref.load %arg2[%c33_102] : memref<100xf32, #tpu.memory_space<smem>>
    %405 = vector.broadcast %404 : f32 to vector<8x128xf32>
    %406 = arith.addf %403, %405 : vector<8x128xf32>
    %cst_103 = arith.constant 0.000000e+00 : f32
    %407 = vector.broadcast %cst_103 : f32 to vector<8x128xf32>
    %408 = arith.maximumf %406, %407 : vector<8x128xf32>
    %c33_104 = arith.constant 33 : index
    %409 = memref.load %arg3[%c33_104] : memref<100xf32, #tpu.memory_space<smem>>
    %410 = vector.broadcast %409 : f32 to vector<8x128xf32>
    %411 = arith.mulf %408, %410 : vector<8x128xf32>
    %412 = arith.addf %400, %411 : vector<8x128xf32>
    %c34 = arith.constant 34 : index
    %413 = memref.load %arg1[%c34] : memref<100xf32, #tpu.memory_space<smem>>
    %414 = vector.broadcast %413 : f32 to vector<8x128xf32>
    %415 = arith.mulf %0, %414 : vector<8x128xf32>
    %c34_105 = arith.constant 34 : index
    %416 = memref.load %arg2[%c34_105] : memref<100xf32, #tpu.memory_space<smem>>
    %417 = vector.broadcast %416 : f32 to vector<8x128xf32>
    %418 = arith.addf %415, %417 : vector<8x128xf32>
    %cst_106 = arith.constant 0.000000e+00 : f32
    %419 = vector.broadcast %cst_106 : f32 to vector<8x128xf32>
    %420 = arith.maximumf %418, %419 : vector<8x128xf32>
    %c34_107 = arith.constant 34 : index
    %421 = memref.load %arg3[%c34_107] : memref<100xf32, #tpu.memory_space<smem>>
    %422 = vector.broadcast %421 : f32 to vector<8x128xf32>
    %423 = arith.mulf %420, %422 : vector<8x128xf32>
    %424 = arith.addf %412, %423 : vector<8x128xf32>
    %c35 = arith.constant 35 : index
    %425 = memref.load %arg1[%c35] : memref<100xf32, #tpu.memory_space<smem>>
    %426 = vector.broadcast %425 : f32 to vector<8x128xf32>
    %427 = arith.mulf %0, %426 : vector<8x128xf32>
    %c35_108 = arith.constant 35 : index
    %428 = memref.load %arg2[%c35_108] : memref<100xf32, #tpu.memory_space<smem>>
    %429 = vector.broadcast %428 : f32 to vector<8x128xf32>
    %430 = arith.addf %427, %429 : vector<8x128xf32>
    %cst_109 = arith.constant 0.000000e+00 : f32
    %431 = vector.broadcast %cst_109 : f32 to vector<8x128xf32>
    %432 = arith.maximumf %430, %431 : vector<8x128xf32>
    %c35_110 = arith.constant 35 : index
    %433 = memref.load %arg3[%c35_110] : memref<100xf32, #tpu.memory_space<smem>>
    %434 = vector.broadcast %433 : f32 to vector<8x128xf32>
    %435 = arith.mulf %432, %434 : vector<8x128xf32>
    %436 = arith.addf %424, %435 : vector<8x128xf32>
    %c36 = arith.constant 36 : index
    %437 = memref.load %arg1[%c36] : memref<100xf32, #tpu.memory_space<smem>>
    %438 = vector.broadcast %437 : f32 to vector<8x128xf32>
    %439 = arith.mulf %0, %438 : vector<8x128xf32>
    %c36_111 = arith.constant 36 : index
    %440 = memref.load %arg2[%c36_111] : memref<100xf32, #tpu.memory_space<smem>>
    %441 = vector.broadcast %440 : f32 to vector<8x128xf32>
    %442 = arith.addf %439, %441 : vector<8x128xf32>
    %cst_112 = arith.constant 0.000000e+00 : f32
    %443 = vector.broadcast %cst_112 : f32 to vector<8x128xf32>
    %444 = arith.maximumf %442, %443 : vector<8x128xf32>
    %c36_113 = arith.constant 36 : index
    %445 = memref.load %arg3[%c36_113] : memref<100xf32, #tpu.memory_space<smem>>
    %446 = vector.broadcast %445 : f32 to vector<8x128xf32>
    %447 = arith.mulf %444, %446 : vector<8x128xf32>
    %448 = arith.addf %436, %447 : vector<8x128xf32>
    %c37 = arith.constant 37 : index
    %449 = memref.load %arg1[%c37] : memref<100xf32, #tpu.memory_space<smem>>
    %450 = vector.broadcast %449 : f32 to vector<8x128xf32>
    %451 = arith.mulf %0, %450 : vector<8x128xf32>
    %c37_114 = arith.constant 37 : index
    %452 = memref.load %arg2[%c37_114] : memref<100xf32, #tpu.memory_space<smem>>
    %453 = vector.broadcast %452 : f32 to vector<8x128xf32>
    %454 = arith.addf %451, %453 : vector<8x128xf32>
    %cst_115 = arith.constant 0.000000e+00 : f32
    %455 = vector.broadcast %cst_115 : f32 to vector<8x128xf32>
    %456 = arith.maximumf %454, %455 : vector<8x128xf32>
    %c37_116 = arith.constant 37 : index
    %457 = memref.load %arg3[%c37_116] : memref<100xf32, #tpu.memory_space<smem>>
    %458 = vector.broadcast %457 : f32 to vector<8x128xf32>
    %459 = arith.mulf %456, %458 : vector<8x128xf32>
    %460 = arith.addf %448, %459 : vector<8x128xf32>
    %c38 = arith.constant 38 : index
    %461 = memref.load %arg1[%c38] : memref<100xf32, #tpu.memory_space<smem>>
    %462 = vector.broadcast %461 : f32 to vector<8x128xf32>
    %463 = arith.mulf %0, %462 : vector<8x128xf32>
    %c38_117 = arith.constant 38 : index
    %464 = memref.load %arg2[%c38_117] : memref<100xf32, #tpu.memory_space<smem>>
    %465 = vector.broadcast %464 : f32 to vector<8x128xf32>
    %466 = arith.addf %463, %465 : vector<8x128xf32>
    %cst_118 = arith.constant 0.000000e+00 : f32
    %467 = vector.broadcast %cst_118 : f32 to vector<8x128xf32>
    %468 = arith.maximumf %466, %467 : vector<8x128xf32>
    %c38_119 = arith.constant 38 : index
    %469 = memref.load %arg3[%c38_119] : memref<100xf32, #tpu.memory_space<smem>>
    %470 = vector.broadcast %469 : f32 to vector<8x128xf32>
    %471 = arith.mulf %468, %470 : vector<8x128xf32>
    %472 = arith.addf %460, %471 : vector<8x128xf32>
    %c39 = arith.constant 39 : index
    %473 = memref.load %arg1[%c39] : memref<100xf32, #tpu.memory_space<smem>>
    %474 = vector.broadcast %473 : f32 to vector<8x128xf32>
    %475 = arith.mulf %0, %474 : vector<8x128xf32>
    %c39_120 = arith.constant 39 : index
    %476 = memref.load %arg2[%c39_120] : memref<100xf32, #tpu.memory_space<smem>>
    %477 = vector.broadcast %476 : f32 to vector<8x128xf32>
    %478 = arith.addf %475, %477 : vector<8x128xf32>
    %cst_121 = arith.constant 0.000000e+00 : f32
    %479 = vector.broadcast %cst_121 : f32 to vector<8x128xf32>
    %480 = arith.maximumf %478, %479 : vector<8x128xf32>
    %c39_122 = arith.constant 39 : index
    %481 = memref.load %arg3[%c39_122] : memref<100xf32, #tpu.memory_space<smem>>
    %482 = vector.broadcast %481 : f32 to vector<8x128xf32>
    %483 = arith.mulf %480, %482 : vector<8x128xf32>
    %484 = arith.addf %472, %483 : vector<8x128xf32>
    %c40 = arith.constant 40 : index
    %485 = memref.load %arg1[%c40] : memref<100xf32, #tpu.memory_space<smem>>
    %486 = vector.broadcast %485 : f32 to vector<8x128xf32>
    %487 = arith.mulf %0, %486 : vector<8x128xf32>
    %c40_123 = arith.constant 40 : index
    %488 = memref.load %arg2[%c40_123] : memref<100xf32, #tpu.memory_space<smem>>
    %489 = vector.broadcast %488 : f32 to vector<8x128xf32>
    %490 = arith.addf %487, %489 : vector<8x128xf32>
    %cst_124 = arith.constant 0.000000e+00 : f32
    %491 = vector.broadcast %cst_124 : f32 to vector<8x128xf32>
    %492 = arith.maximumf %490, %491 : vector<8x128xf32>
    %c40_125 = arith.constant 40 : index
    %493 = memref.load %arg3[%c40_125] : memref<100xf32, #tpu.memory_space<smem>>
    %494 = vector.broadcast %493 : f32 to vector<8x128xf32>
    %495 = arith.mulf %492, %494 : vector<8x128xf32>
    %496 = arith.addf %484, %495 : vector<8x128xf32>
    %c41 = arith.constant 41 : index
    %497 = memref.load %arg1[%c41] : memref<100xf32, #tpu.memory_space<smem>>
    %498 = vector.broadcast %497 : f32 to vector<8x128xf32>
    %499 = arith.mulf %0, %498 : vector<8x128xf32>
    %c41_126 = arith.constant 41 : index
    %500 = memref.load %arg2[%c41_126] : memref<100xf32, #tpu.memory_space<smem>>
    %501 = vector.broadcast %500 : f32 to vector<8x128xf32>
    %502 = arith.addf %499, %501 : vector<8x128xf32>
    %cst_127 = arith.constant 0.000000e+00 : f32
    %503 = vector.broadcast %cst_127 : f32 to vector<8x128xf32>
    %504 = arith.maximumf %502, %503 : vector<8x128xf32>
    %c41_128 = arith.constant 41 : index
    %505 = memref.load %arg3[%c41_128] : memref<100xf32, #tpu.memory_space<smem>>
    %506 = vector.broadcast %505 : f32 to vector<8x128xf32>
    %507 = arith.mulf %504, %506 : vector<8x128xf32>
    %508 = arith.addf %496, %507 : vector<8x128xf32>
    %c42 = arith.constant 42 : index
    %509 = memref.load %arg1[%c42] : memref<100xf32, #tpu.memory_space<smem>>
    %510 = vector.broadcast %509 : f32 to vector<8x128xf32>
    %511 = arith.mulf %0, %510 : vector<8x128xf32>
    %c42_129 = arith.constant 42 : index
    %512 = memref.load %arg2[%c42_129] : memref<100xf32, #tpu.memory_space<smem>>
    %513 = vector.broadcast %512 : f32 to vector<8x128xf32>
    %514 = arith.addf %511, %513 : vector<8x128xf32>
    %cst_130 = arith.constant 0.000000e+00 : f32
    %515 = vector.broadcast %cst_130 : f32 to vector<8x128xf32>
    %516 = arith.maximumf %514, %515 : vector<8x128xf32>
    %c42_131 = arith.constant 42 : index
    %517 = memref.load %arg3[%c42_131] : memref<100xf32, #tpu.memory_space<smem>>
    %518 = vector.broadcast %517 : f32 to vector<8x128xf32>
    %519 = arith.mulf %516, %518 : vector<8x128xf32>
    %520 = arith.addf %508, %519 : vector<8x128xf32>
    %c43 = arith.constant 43 : index
    %521 = memref.load %arg1[%c43] : memref<100xf32, #tpu.memory_space<smem>>
    %522 = vector.broadcast %521 : f32 to vector<8x128xf32>
    %523 = arith.mulf %0, %522 : vector<8x128xf32>
    %c43_132 = arith.constant 43 : index
    %524 = memref.load %arg2[%c43_132] : memref<100xf32, #tpu.memory_space<smem>>
    %525 = vector.broadcast %524 : f32 to vector<8x128xf32>
    %526 = arith.addf %523, %525 : vector<8x128xf32>
    %cst_133 = arith.constant 0.000000e+00 : f32
    %527 = vector.broadcast %cst_133 : f32 to vector<8x128xf32>
    %528 = arith.maximumf %526, %527 : vector<8x128xf32>
    %c43_134 = arith.constant 43 : index
    %529 = memref.load %arg3[%c43_134] : memref<100xf32, #tpu.memory_space<smem>>
    %530 = vector.broadcast %529 : f32 to vector<8x128xf32>
    %531 = arith.mulf %528, %530 : vector<8x128xf32>
    %532 = arith.addf %520, %531 : vector<8x128xf32>
    %c44 = arith.constant 44 : index
    %533 = memref.load %arg1[%c44] : memref<100xf32, #tpu.memory_space<smem>>
    %534 = vector.broadcast %533 : f32 to vector<8x128xf32>
    %535 = arith.mulf %0, %534 : vector<8x128xf32>
    %c44_135 = arith.constant 44 : index
    %536 = memref.load %arg2[%c44_135] : memref<100xf32, #tpu.memory_space<smem>>
    %537 = vector.broadcast %536 : f32 to vector<8x128xf32>
    %538 = arith.addf %535, %537 : vector<8x128xf32>
    %cst_136 = arith.constant 0.000000e+00 : f32
    %539 = vector.broadcast %cst_136 : f32 to vector<8x128xf32>
    %540 = arith.maximumf %538, %539 : vector<8x128xf32>
    %c44_137 = arith.constant 44 : index
    %541 = memref.load %arg3[%c44_137] : memref<100xf32, #tpu.memory_space<smem>>
    %542 = vector.broadcast %541 : f32 to vector<8x128xf32>
    %543 = arith.mulf %540, %542 : vector<8x128xf32>
    %544 = arith.addf %532, %543 : vector<8x128xf32>
    %c45 = arith.constant 45 : index
    %545 = memref.load %arg1[%c45] : memref<100xf32, #tpu.memory_space<smem>>
    %546 = vector.broadcast %545 : f32 to vector<8x128xf32>
    %547 = arith.mulf %0, %546 : vector<8x128xf32>
    %c45_138 = arith.constant 45 : index
    %548 = memref.load %arg2[%c45_138] : memref<100xf32, #tpu.memory_space<smem>>
    %549 = vector.broadcast %548 : f32 to vector<8x128xf32>
    %550 = arith.addf %547, %549 : vector<8x128xf32>
    %cst_139 = arith.constant 0.000000e+00 : f32
    %551 = vector.broadcast %cst_139 : f32 to vector<8x128xf32>
    %552 = arith.maximumf %550, %551 : vector<8x128xf32>
    %c45_140 = arith.constant 45 : index
    %553 = memref.load %arg3[%c45_140] : memref<100xf32, #tpu.memory_space<smem>>
    %554 = vector.broadcast %553 : f32 to vector<8x128xf32>
    %555 = arith.mulf %552, %554 : vector<8x128xf32>
    %556 = arith.addf %544, %555 : vector<8x128xf32>
    %c46 = arith.constant 46 : index
    %557 = memref.load %arg1[%c46] : memref<100xf32, #tpu.memory_space<smem>>
    %558 = vector.broadcast %557 : f32 to vector<8x128xf32>
    %559 = arith.mulf %0, %558 : vector<8x128xf32>
    %c46_141 = arith.constant 46 : index
    %560 = memref.load %arg2[%c46_141] : memref<100xf32, #tpu.memory_space<smem>>
    %561 = vector.broadcast %560 : f32 to vector<8x128xf32>
    %562 = arith.addf %559, %561 : vector<8x128xf32>
    %cst_142 = arith.constant 0.000000e+00 : f32
    %563 = vector.broadcast %cst_142 : f32 to vector<8x128xf32>
    %564 = arith.maximumf %562, %563 : vector<8x128xf32>
    %c46_143 = arith.constant 46 : index
    %565 = memref.load %arg3[%c46_143] : memref<100xf32, #tpu.memory_space<smem>>
    %566 = vector.broadcast %565 : f32 to vector<8x128xf32>
    %567 = arith.mulf %564, %566 : vector<8x128xf32>
    %568 = arith.addf %556, %567 : vector<8x128xf32>
    %c47 = arith.constant 47 : index
    %569 = memref.load %arg1[%c47] : memref<100xf32, #tpu.memory_space<smem>>
    %570 = vector.broadcast %569 : f32 to vector<8x128xf32>
    %571 = arith.mulf %0, %570 : vector<8x128xf32>
    %c47_144 = arith.constant 47 : index
    %572 = memref.load %arg2[%c47_144] : memref<100xf32, #tpu.memory_space<smem>>
    %573 = vector.broadcast %572 : f32 to vector<8x128xf32>
    %574 = arith.addf %571, %573 : vector<8x128xf32>
    %cst_145 = arith.constant 0.000000e+00 : f32
    %575 = vector.broadcast %cst_145 : f32 to vector<8x128xf32>
    %576 = arith.maximumf %574, %575 : vector<8x128xf32>
    %c47_146 = arith.constant 47 : index
    %577 = memref.load %arg3[%c47_146] : memref<100xf32, #tpu.memory_space<smem>>
    %578 = vector.broadcast %577 : f32 to vector<8x128xf32>
    %579 = arith.mulf %576, %578 : vector<8x128xf32>
    %580 = arith.addf %568, %579 : vector<8x128xf32>
    %c48 = arith.constant 48 : index
    %581 = memref.load %arg1[%c48] : memref<100xf32, #tpu.memory_space<smem>>
    %582 = vector.broadcast %581 : f32 to vector<8x128xf32>
    %583 = arith.mulf %0, %582 : vector<8x128xf32>
    %c48_147 = arith.constant 48 : index
    %584 = memref.load %arg2[%c48_147] : memref<100xf32, #tpu.memory_space<smem>>
    %585 = vector.broadcast %584 : f32 to vector<8x128xf32>
    %586 = arith.addf %583, %585 : vector<8x128xf32>
    %cst_148 = arith.constant 0.000000e+00 : f32
    %587 = vector.broadcast %cst_148 : f32 to vector<8x128xf32>
    %588 = arith.maximumf %586, %587 : vector<8x128xf32>
    %c48_149 = arith.constant 48 : index
    %589 = memref.load %arg3[%c48_149] : memref<100xf32, #tpu.memory_space<smem>>
    %590 = vector.broadcast %589 : f32 to vector<8x128xf32>
    %591 = arith.mulf %588, %590 : vector<8x128xf32>
    %592 = arith.addf %580, %591 : vector<8x128xf32>
    %c49 = arith.constant 49 : index
    %593 = memref.load %arg1[%c49] : memref<100xf32, #tpu.memory_space<smem>>
    %594 = vector.broadcast %593 : f32 to vector<8x128xf32>
    %595 = arith.mulf %0, %594 : vector<8x128xf32>
    %c49_150 = arith.constant 49 : index
    %596 = memref.load %arg2[%c49_150] : memref<100xf32, #tpu.memory_space<smem>>
    %597 = vector.broadcast %596 : f32 to vector<8x128xf32>
    %598 = arith.addf %595, %597 : vector<8x128xf32>
    %cst_151 = arith.constant 0.000000e+00 : f32
    %599 = vector.broadcast %cst_151 : f32 to vector<8x128xf32>
    %600 = arith.maximumf %598, %599 : vector<8x128xf32>
    %c49_152 = arith.constant 49 : index
    %601 = memref.load %arg3[%c49_152] : memref<100xf32, #tpu.memory_space<smem>>
    %602 = vector.broadcast %601 : f32 to vector<8x128xf32>
    %603 = arith.mulf %600, %602 : vector<8x128xf32>
    %604 = arith.addf %592, %603 : vector<8x128xf32>
    %c50 = arith.constant 50 : index
    %605 = memref.load %arg1[%c50] : memref<100xf32, #tpu.memory_space<smem>>
    %606 = vector.broadcast %605 : f32 to vector<8x128xf32>
    %607 = arith.mulf %0, %606 : vector<8x128xf32>
    %c50_153 = arith.constant 50 : index
    %608 = memref.load %arg2[%c50_153] : memref<100xf32, #tpu.memory_space<smem>>
    %609 = vector.broadcast %608 : f32 to vector<8x128xf32>
    %610 = arith.addf %607, %609 : vector<8x128xf32>
    %cst_154 = arith.constant 0.000000e+00 : f32
    %611 = vector.broadcast %cst_154 : f32 to vector<8x128xf32>
    %612 = arith.maximumf %610, %611 : vector<8x128xf32>
    %c50_155 = arith.constant 50 : index
    %613 = memref.load %arg3[%c50_155] : memref<100xf32, #tpu.memory_space<smem>>
    %614 = vector.broadcast %613 : f32 to vector<8x128xf32>
    %615 = arith.mulf %612, %614 : vector<8x128xf32>
    %616 = arith.addf %604, %615 : vector<8x128xf32>
    %c51 = arith.constant 51 : index
    %617 = memref.load %arg1[%c51] : memref<100xf32, #tpu.memory_space<smem>>
    %618 = vector.broadcast %617 : f32 to vector<8x128xf32>
    %619 = arith.mulf %0, %618 : vector<8x128xf32>
    %c51_156 = arith.constant 51 : index
    %620 = memref.load %arg2[%c51_156] : memref<100xf32, #tpu.memory_space<smem>>
    %621 = vector.broadcast %620 : f32 to vector<8x128xf32>
    %622 = arith.addf %619, %621 : vector<8x128xf32>
    %cst_157 = arith.constant 0.000000e+00 : f32
    %623 = vector.broadcast %cst_157 : f32 to vector<8x128xf32>
    %624 = arith.maximumf %622, %623 : vector<8x128xf32>
    %c51_158 = arith.constant 51 : index
    %625 = memref.load %arg3[%c51_158] : memref<100xf32, #tpu.memory_space<smem>>
    %626 = vector.broadcast %625 : f32 to vector<8x128xf32>
    %627 = arith.mulf %624, %626 : vector<8x128xf32>
    %628 = arith.addf %616, %627 : vector<8x128xf32>
    %c52 = arith.constant 52 : index
    %629 = memref.load %arg1[%c52] : memref<100xf32, #tpu.memory_space<smem>>
    %630 = vector.broadcast %629 : f32 to vector<8x128xf32>
    %631 = arith.mulf %0, %630 : vector<8x128xf32>
    %c52_159 = arith.constant 52 : index
    %632 = memref.load %arg2[%c52_159] : memref<100xf32, #tpu.memory_space<smem>>
    %633 = vector.broadcast %632 : f32 to vector<8x128xf32>
    %634 = arith.addf %631, %633 : vector<8x128xf32>
    %cst_160 = arith.constant 0.000000e+00 : f32
    %635 = vector.broadcast %cst_160 : f32 to vector<8x128xf32>
    %636 = arith.maximumf %634, %635 : vector<8x128xf32>
    %c52_161 = arith.constant 52 : index
    %637 = memref.load %arg3[%c52_161] : memref<100xf32, #tpu.memory_space<smem>>
    %638 = vector.broadcast %637 : f32 to vector<8x128xf32>
    %639 = arith.mulf %636, %638 : vector<8x128xf32>
    %640 = arith.addf %628, %639 : vector<8x128xf32>
    %c53 = arith.constant 53 : index
    %641 = memref.load %arg1[%c53] : memref<100xf32, #tpu.memory_space<smem>>
    %642 = vector.broadcast %641 : f32 to vector<8x128xf32>
    %643 = arith.mulf %0, %642 : vector<8x128xf32>
    %c53_162 = arith.constant 53 : index
    %644 = memref.load %arg2[%c53_162] : memref<100xf32, #tpu.memory_space<smem>>
    %645 = vector.broadcast %644 : f32 to vector<8x128xf32>
    %646 = arith.addf %643, %645 : vector<8x128xf32>
    %cst_163 = arith.constant 0.000000e+00 : f32
    %647 = vector.broadcast %cst_163 : f32 to vector<8x128xf32>
    %648 = arith.maximumf %646, %647 : vector<8x128xf32>
    %c53_164 = arith.constant 53 : index
    %649 = memref.load %arg3[%c53_164] : memref<100xf32, #tpu.memory_space<smem>>
    %650 = vector.broadcast %649 : f32 to vector<8x128xf32>
    %651 = arith.mulf %648, %650 : vector<8x128xf32>
    %652 = arith.addf %640, %651 : vector<8x128xf32>
    %c54 = arith.constant 54 : index
    %653 = memref.load %arg1[%c54] : memref<100xf32, #tpu.memory_space<smem>>
    %654 = vector.broadcast %653 : f32 to vector<8x128xf32>
    %655 = arith.mulf %0, %654 : vector<8x128xf32>
    %c54_165 = arith.constant 54 : index
    %656 = memref.load %arg2[%c54_165] : memref<100xf32, #tpu.memory_space<smem>>
    %657 = vector.broadcast %656 : f32 to vector<8x128xf32>
    %658 = arith.addf %655, %657 : vector<8x128xf32>
    %cst_166 = arith.constant 0.000000e+00 : f32
    %659 = vector.broadcast %cst_166 : f32 to vector<8x128xf32>
    %660 = arith.maximumf %658, %659 : vector<8x128xf32>
    %c54_167 = arith.constant 54 : index
    %661 = memref.load %arg3[%c54_167] : memref<100xf32, #tpu.memory_space<smem>>
    %662 = vector.broadcast %661 : f32 to vector<8x128xf32>
    %663 = arith.mulf %660, %662 : vector<8x128xf32>
    %664 = arith.addf %652, %663 : vector<8x128xf32>
    %c55 = arith.constant 55 : index
    %665 = memref.load %arg1[%c55] : memref<100xf32, #tpu.memory_space<smem>>
    %666 = vector.broadcast %665 : f32 to vector<8x128xf32>
    %667 = arith.mulf %0, %666 : vector<8x128xf32>
    %c55_168 = arith.constant 55 : index
    %668 = memref.load %arg2[%c55_168] : memref<100xf32, #tpu.memory_space<smem>>
    %669 = vector.broadcast %668 : f32 to vector<8x128xf32>
    %670 = arith.addf %667, %669 : vector<8x128xf32>
    %cst_169 = arith.constant 0.000000e+00 : f32
    %671 = vector.broadcast %cst_169 : f32 to vector<8x128xf32>
    %672 = arith.maximumf %670, %671 : vector<8x128xf32>
    %c55_170 = arith.constant 55 : index
    %673 = memref.load %arg3[%c55_170] : memref<100xf32, #tpu.memory_space<smem>>
    %674 = vector.broadcast %673 : f32 to vector<8x128xf32>
    %675 = arith.mulf %672, %674 : vector<8x128xf32>
    %676 = arith.addf %664, %675 : vector<8x128xf32>
    %c56 = arith.constant 56 : index
    %677 = memref.load %arg1[%c56] : memref<100xf32, #tpu.memory_space<smem>>
    %678 = vector.broadcast %677 : f32 to vector<8x128xf32>
    %679 = arith.mulf %0, %678 : vector<8x128xf32>
    %c56_171 = arith.constant 56 : index
    %680 = memref.load %arg2[%c56_171] : memref<100xf32, #tpu.memory_space<smem>>
    %681 = vector.broadcast %680 : f32 to vector<8x128xf32>
    %682 = arith.addf %679, %681 : vector<8x128xf32>
    %cst_172 = arith.constant 0.000000e+00 : f32
    %683 = vector.broadcast %cst_172 : f32 to vector<8x128xf32>
    %684 = arith.maximumf %682, %683 : vector<8x128xf32>
    %c56_173 = arith.constant 56 : index
    %685 = memref.load %arg3[%c56_173] : memref<100xf32, #tpu.memory_space<smem>>
    %686 = vector.broadcast %685 : f32 to vector<8x128xf32>
    %687 = arith.mulf %684, %686 : vector<8x128xf32>
    %688 = arith.addf %676, %687 : vector<8x128xf32>
    %c57 = arith.constant 57 : index
    %689 = memref.load %arg1[%c57] : memref<100xf32, #tpu.memory_space<smem>>
    %690 = vector.broadcast %689 : f32 to vector<8x128xf32>
    %691 = arith.mulf %0, %690 : vector<8x128xf32>
    %c57_174 = arith.constant 57 : index
    %692 = memref.load %arg2[%c57_174] : memref<100xf32, #tpu.memory_space<smem>>
    %693 = vector.broadcast %692 : f32 to vector<8x128xf32>
    %694 = arith.addf %691, %693 : vector<8x128xf32>
    %cst_175 = arith.constant 0.000000e+00 : f32
    %695 = vector.broadcast %cst_175 : f32 to vector<8x128xf32>
    %696 = arith.maximumf %694, %695 : vector<8x128xf32>
    %c57_176 = arith.constant 57 : index
    %697 = memref.load %arg3[%c57_176] : memref<100xf32, #tpu.memory_space<smem>>
    %698 = vector.broadcast %697 : f32 to vector<8x128xf32>
    %699 = arith.mulf %696, %698 : vector<8x128xf32>
    %700 = arith.addf %688, %699 : vector<8x128xf32>
    %c58 = arith.constant 58 : index
    %701 = memref.load %arg1[%c58] : memref<100xf32, #tpu.memory_space<smem>>
    %702 = vector.broadcast %701 : f32 to vector<8x128xf32>
    %703 = arith.mulf %0, %702 : vector<8x128xf32>
    %c58_177 = arith.constant 58 : index
    %704 = memref.load %arg2[%c58_177] : memref<100xf32, #tpu.memory_space<smem>>
    %705 = vector.broadcast %704 : f32 to vector<8x128xf32>
    %706 = arith.addf %703, %705 : vector<8x128xf32>
    %cst_178 = arith.constant 0.000000e+00 : f32
    %707 = vector.broadcast %cst_178 : f32 to vector<8x128xf32>
    %708 = arith.maximumf %706, %707 : vector<8x128xf32>
    %c58_179 = arith.constant 58 : index
    %709 = memref.load %arg3[%c58_179] : memref<100xf32, #tpu.memory_space<smem>>
    %710 = vector.broadcast %709 : f32 to vector<8x128xf32>
    %711 = arith.mulf %708, %710 : vector<8x128xf32>
    %712 = arith.addf %700, %711 : vector<8x128xf32>
    %c59 = arith.constant 59 : index
    %713 = memref.load %arg1[%c59] : memref<100xf32, #tpu.memory_space<smem>>
    %714 = vector.broadcast %713 : f32 to vector<8x128xf32>
    %715 = arith.mulf %0, %714 : vector<8x128xf32>
    %c59_180 = arith.constant 59 : index
    %716 = memref.load %arg2[%c59_180] : memref<100xf32, #tpu.memory_space<smem>>
    %717 = vector.broadcast %716 : f32 to vector<8x128xf32>
    %718 = arith.addf %715, %717 : vector<8x128xf32>
    %cst_181 = arith.constant 0.000000e+00 : f32
    %719 = vector.broadcast %cst_181 : f32 to vector<8x128xf32>
    %720 = arith.maximumf %718, %719 : vector<8x128xf32>
    %c59_182 = arith.constant 59 : index
    %721 = memref.load %arg3[%c59_182] : memref<100xf32, #tpu.memory_space<smem>>
    %722 = vector.broadcast %721 : f32 to vector<8x128xf32>
    %723 = arith.mulf %720, %722 : vector<8x128xf32>
    %724 = arith.addf %712, %723 : vector<8x128xf32>
    %c60 = arith.constant 60 : index
    %725 = memref.load %arg1[%c60] : memref<100xf32, #tpu.memory_space<smem>>
    %726 = vector.broadcast %725 : f32 to vector<8x128xf32>
    %727 = arith.mulf %0, %726 : vector<8x128xf32>
    %c60_183 = arith.constant 60 : index
    %728 = memref.load %arg2[%c60_183] : memref<100xf32, #tpu.memory_space<smem>>
    %729 = vector.broadcast %728 : f32 to vector<8x128xf32>
    %730 = arith.addf %727, %729 : vector<8x128xf32>
    %cst_184 = arith.constant 0.000000e+00 : f32
    %731 = vector.broadcast %cst_184 : f32 to vector<8x128xf32>
    %732 = arith.maximumf %730, %731 : vector<8x128xf32>
    %c60_185 = arith.constant 60 : index
    %733 = memref.load %arg3[%c60_185] : memref<100xf32, #tpu.memory_space<smem>>
    %734 = vector.broadcast %733 : f32 to vector<8x128xf32>
    %735 = arith.mulf %732, %734 : vector<8x128xf32>
    %736 = arith.addf %724, %735 : vector<8x128xf32>
    %c61 = arith.constant 61 : index
    %737 = memref.load %arg1[%c61] : memref<100xf32, #tpu.memory_space<smem>>
    %738 = vector.broadcast %737 : f32 to vector<8x128xf32>
    %739 = arith.mulf %0, %738 : vector<8x128xf32>
    %c61_186 = arith.constant 61 : index
    %740 = memref.load %arg2[%c61_186] : memref<100xf32, #tpu.memory_space<smem>>
    %741 = vector.broadcast %740 : f32 to vector<8x128xf32>
    %742 = arith.addf %739, %741 : vector<8x128xf32>
    %cst_187 = arith.constant 0.000000e+00 : f32
    %743 = vector.broadcast %cst_187 : f32 to vector<8x128xf32>
    %744 = arith.maximumf %742, %743 : vector<8x128xf32>
    %c61_188 = arith.constant 61 : index
    %745 = memref.load %arg3[%c61_188] : memref<100xf32, #tpu.memory_space<smem>>
    %746 = vector.broadcast %745 : f32 to vector<8x128xf32>
    %747 = arith.mulf %744, %746 : vector<8x128xf32>
    %748 = arith.addf %736, %747 : vector<8x128xf32>
    %c62 = arith.constant 62 : index
    %749 = memref.load %arg1[%c62] : memref<100xf32, #tpu.memory_space<smem>>
    %750 = vector.broadcast %749 : f32 to vector<8x128xf32>
    %751 = arith.mulf %0, %750 : vector<8x128xf32>
    %c62_189 = arith.constant 62 : index
    %752 = memref.load %arg2[%c62_189] : memref<100xf32, #tpu.memory_space<smem>>
    %753 = vector.broadcast %752 : f32 to vector<8x128xf32>
    %754 = arith.addf %751, %753 : vector<8x128xf32>
    %cst_190 = arith.constant 0.000000e+00 : f32
    %755 = vector.broadcast %cst_190 : f32 to vector<8x128xf32>
    %756 = arith.maximumf %754, %755 : vector<8x128xf32>
    %c62_191 = arith.constant 62 : index
    %757 = memref.load %arg3[%c62_191] : memref<100xf32, #tpu.memory_space<smem>>
    %758 = vector.broadcast %757 : f32 to vector<8x128xf32>
    %759 = arith.mulf %756, %758 : vector<8x128xf32>
    %760 = arith.addf %748, %759 : vector<8x128xf32>
    %c63 = arith.constant 63 : index
    %761 = memref.load %arg1[%c63] : memref<100xf32, #tpu.memory_space<smem>>
    %762 = vector.broadcast %761 : f32 to vector<8x128xf32>
    %763 = arith.mulf %0, %762 : vector<8x128xf32>
    %c63_192 = arith.constant 63 : index
    %764 = memref.load %arg2[%c63_192] : memref<100xf32, #tpu.memory_space<smem>>
    %765 = vector.broadcast %764 : f32 to vector<8x128xf32>
    %766 = arith.addf %763, %765 : vector<8x128xf32>
    %cst_193 = arith.constant 0.000000e+00 : f32
    %767 = vector.broadcast %cst_193 : f32 to vector<8x128xf32>
    %768 = arith.maximumf %766, %767 : vector<8x128xf32>
    %c63_194 = arith.constant 63 : index
    %769 = memref.load %arg3[%c63_194] : memref<100xf32, #tpu.memory_space<smem>>
    %770 = vector.broadcast %769 : f32 to vector<8x128xf32>
    %771 = arith.mulf %768, %770 : vector<8x128xf32>
    %772 = arith.addf %760, %771 : vector<8x128xf32>
    %c64 = arith.constant 64 : index
    %773 = memref.load %arg1[%c64] : memref<100xf32, #tpu.memory_space<smem>>
    %774 = vector.broadcast %773 : f32 to vector<8x128xf32>
    %775 = arith.mulf %0, %774 : vector<8x128xf32>
    %c64_195 = arith.constant 64 : index
    %776 = memref.load %arg2[%c64_195] : memref<100xf32, #tpu.memory_space<smem>>
    %777 = vector.broadcast %776 : f32 to vector<8x128xf32>
    %778 = arith.addf %775, %777 : vector<8x128xf32>
    %cst_196 = arith.constant 0.000000e+00 : f32
    %779 = vector.broadcast %cst_196 : f32 to vector<8x128xf32>
    %780 = arith.maximumf %778, %779 : vector<8x128xf32>
    %c64_197 = arith.constant 64 : index
    %781 = memref.load %arg3[%c64_197] : memref<100xf32, #tpu.memory_space<smem>>
    %782 = vector.broadcast %781 : f32 to vector<8x128xf32>
    %783 = arith.mulf %780, %782 : vector<8x128xf32>
    %784 = arith.addf %772, %783 : vector<8x128xf32>
    %c65 = arith.constant 65 : index
    %785 = memref.load %arg1[%c65] : memref<100xf32, #tpu.memory_space<smem>>
    %786 = vector.broadcast %785 : f32 to vector<8x128xf32>
    %787 = arith.mulf %0, %786 : vector<8x128xf32>
    %c65_198 = arith.constant 65 : index
    %788 = memref.load %arg2[%c65_198] : memref<100xf32, #tpu.memory_space<smem>>
    %789 = vector.broadcast %788 : f32 to vector<8x128xf32>
    %790 = arith.addf %787, %789 : vector<8x128xf32>
    %cst_199 = arith.constant 0.000000e+00 : f32
    %791 = vector.broadcast %cst_199 : f32 to vector<8x128xf32>
    %792 = arith.maximumf %790, %791 : vector<8x128xf32>
    %c65_200 = arith.constant 65 : index
    %793 = memref.load %arg3[%c65_200] : memref<100xf32, #tpu.memory_space<smem>>
    %794 = vector.broadcast %793 : f32 to vector<8x128xf32>
    %795 = arith.mulf %792, %794 : vector<8x128xf32>
    %796 = arith.addf %784, %795 : vector<8x128xf32>
    %c66 = arith.constant 66 : index
    %797 = memref.load %arg1[%c66] : memref<100xf32, #tpu.memory_space<smem>>
    %798 = vector.broadcast %797 : f32 to vector<8x128xf32>
    %799 = arith.mulf %0, %798 : vector<8x128xf32>
    %c66_201 = arith.constant 66 : index
    %800 = memref.load %arg2[%c66_201] : memref<100xf32, #tpu.memory_space<smem>>
    %801 = vector.broadcast %800 : f32 to vector<8x128xf32>
    %802 = arith.addf %799, %801 : vector<8x128xf32>
    %cst_202 = arith.constant 0.000000e+00 : f32
    %803 = vector.broadcast %cst_202 : f32 to vector<8x128xf32>
    %804 = arith.maximumf %802, %803 : vector<8x128xf32>
    %c66_203 = arith.constant 66 : index
    %805 = memref.load %arg3[%c66_203] : memref<100xf32, #tpu.memory_space<smem>>
    %806 = vector.broadcast %805 : f32 to vector<8x128xf32>
    %807 = arith.mulf %804, %806 : vector<8x128xf32>
    %808 = arith.addf %796, %807 : vector<8x128xf32>
    %c67 = arith.constant 67 : index
    %809 = memref.load %arg1[%c67] : memref<100xf32, #tpu.memory_space<smem>>
    %810 = vector.broadcast %809 : f32 to vector<8x128xf32>
    %811 = arith.mulf %0, %810 : vector<8x128xf32>
    %c67_204 = arith.constant 67 : index
    %812 = memref.load %arg2[%c67_204] : memref<100xf32, #tpu.memory_space<smem>>
    %813 = vector.broadcast %812 : f32 to vector<8x128xf32>
    %814 = arith.addf %811, %813 : vector<8x128xf32>
    %cst_205 = arith.constant 0.000000e+00 : f32
    %815 = vector.broadcast %cst_205 : f32 to vector<8x128xf32>
    %816 = arith.maximumf %814, %815 : vector<8x128xf32>
    %c67_206 = arith.constant 67 : index
    %817 = memref.load %arg3[%c67_206] : memref<100xf32, #tpu.memory_space<smem>>
    %818 = vector.broadcast %817 : f32 to vector<8x128xf32>
    %819 = arith.mulf %816, %818 : vector<8x128xf32>
    %820 = arith.addf %808, %819 : vector<8x128xf32>
    %c68 = arith.constant 68 : index
    %821 = memref.load %arg1[%c68] : memref<100xf32, #tpu.memory_space<smem>>
    %822 = vector.broadcast %821 : f32 to vector<8x128xf32>
    %823 = arith.mulf %0, %822 : vector<8x128xf32>
    %c68_207 = arith.constant 68 : index
    %824 = memref.load %arg2[%c68_207] : memref<100xf32, #tpu.memory_space<smem>>
    %825 = vector.broadcast %824 : f32 to vector<8x128xf32>
    %826 = arith.addf %823, %825 : vector<8x128xf32>
    %cst_208 = arith.constant 0.000000e+00 : f32
    %827 = vector.broadcast %cst_208 : f32 to vector<8x128xf32>
    %828 = arith.maximumf %826, %827 : vector<8x128xf32>
    %c68_209 = arith.constant 68 : index
    %829 = memref.load %arg3[%c68_209] : memref<100xf32, #tpu.memory_space<smem>>
    %830 = vector.broadcast %829 : f32 to vector<8x128xf32>
    %831 = arith.mulf %828, %830 : vector<8x128xf32>
    %832 = arith.addf %820, %831 : vector<8x128xf32>
    %c69 = arith.constant 69 : index
    %833 = memref.load %arg1[%c69] : memref<100xf32, #tpu.memory_space<smem>>
    %834 = vector.broadcast %833 : f32 to vector<8x128xf32>
    %835 = arith.mulf %0, %834 : vector<8x128xf32>
    %c69_210 = arith.constant 69 : index
    %836 = memref.load %arg2[%c69_210] : memref<100xf32, #tpu.memory_space<smem>>
    %837 = vector.broadcast %836 : f32 to vector<8x128xf32>
    %838 = arith.addf %835, %837 : vector<8x128xf32>
    %cst_211 = arith.constant 0.000000e+00 : f32
    %839 = vector.broadcast %cst_211 : f32 to vector<8x128xf32>
    %840 = arith.maximumf %838, %839 : vector<8x128xf32>
    %c69_212 = arith.constant 69 : index
    %841 = memref.load %arg3[%c69_212] : memref<100xf32, #tpu.memory_space<smem>>
    %842 = vector.broadcast %841 : f32 to vector<8x128xf32>
    %843 = arith.mulf %840, %842 : vector<8x128xf32>
    %844 = arith.addf %832, %843 : vector<8x128xf32>
    %c70 = arith.constant 70 : index
    %845 = memref.load %arg1[%c70] : memref<100xf32, #tpu.memory_space<smem>>
    %846 = vector.broadcast %845 : f32 to vector<8x128xf32>
    %847 = arith.mulf %0, %846 : vector<8x128xf32>
    %c70_213 = arith.constant 70 : index
    %848 = memref.load %arg2[%c70_213] : memref<100xf32, #tpu.memory_space<smem>>
    %849 = vector.broadcast %848 : f32 to vector<8x128xf32>
    %850 = arith.addf %847, %849 : vector<8x128xf32>
    %cst_214 = arith.constant 0.000000e+00 : f32
    %851 = vector.broadcast %cst_214 : f32 to vector<8x128xf32>
    %852 = arith.maximumf %850, %851 : vector<8x128xf32>
    %c70_215 = arith.constant 70 : index
    %853 = memref.load %arg3[%c70_215] : memref<100xf32, #tpu.memory_space<smem>>
    %854 = vector.broadcast %853 : f32 to vector<8x128xf32>
    %855 = arith.mulf %852, %854 : vector<8x128xf32>
    %856 = arith.addf %844, %855 : vector<8x128xf32>
    %c71 = arith.constant 71 : index
    %857 = memref.load %arg1[%c71] : memref<100xf32, #tpu.memory_space<smem>>
    %858 = vector.broadcast %857 : f32 to vector<8x128xf32>
    %859 = arith.mulf %0, %858 : vector<8x128xf32>
    %c71_216 = arith.constant 71 : index
    %860 = memref.load %arg2[%c71_216] : memref<100xf32, #tpu.memory_space<smem>>
    %861 = vector.broadcast %860 : f32 to vector<8x128xf32>
    %862 = arith.addf %859, %861 : vector<8x128xf32>
    %cst_217 = arith.constant 0.000000e+00 : f32
    %863 = vector.broadcast %cst_217 : f32 to vector<8x128xf32>
    %864 = arith.maximumf %862, %863 : vector<8x128xf32>
    %c71_218 = arith.constant 71 : index
    %865 = memref.load %arg3[%c71_218] : memref<100xf32, #tpu.memory_space<smem>>
    %866 = vector.broadcast %865 : f32 to vector<8x128xf32>
    %867 = arith.mulf %864, %866 : vector<8x128xf32>
    %868 = arith.addf %856, %867 : vector<8x128xf32>
    %c72 = arith.constant 72 : index
    %869 = memref.load %arg1[%c72] : memref<100xf32, #tpu.memory_space<smem>>
    %870 = vector.broadcast %869 : f32 to vector<8x128xf32>
    %871 = arith.mulf %0, %870 : vector<8x128xf32>
    %c72_219 = arith.constant 72 : index
    %872 = memref.load %arg2[%c72_219] : memref<100xf32, #tpu.memory_space<smem>>
    %873 = vector.broadcast %872 : f32 to vector<8x128xf32>
    %874 = arith.addf %871, %873 : vector<8x128xf32>
    %cst_220 = arith.constant 0.000000e+00 : f32
    %875 = vector.broadcast %cst_220 : f32 to vector<8x128xf32>
    %876 = arith.maximumf %874, %875 : vector<8x128xf32>
    %c72_221 = arith.constant 72 : index
    %877 = memref.load %arg3[%c72_221] : memref<100xf32, #tpu.memory_space<smem>>
    %878 = vector.broadcast %877 : f32 to vector<8x128xf32>
    %879 = arith.mulf %876, %878 : vector<8x128xf32>
    %880 = arith.addf %868, %879 : vector<8x128xf32>
    %c73 = arith.constant 73 : index
    %881 = memref.load %arg1[%c73] : memref<100xf32, #tpu.memory_space<smem>>
    %882 = vector.broadcast %881 : f32 to vector<8x128xf32>
    %883 = arith.mulf %0, %882 : vector<8x128xf32>
    %c73_222 = arith.constant 73 : index
    %884 = memref.load %arg2[%c73_222] : memref<100xf32, #tpu.memory_space<smem>>
    %885 = vector.broadcast %884 : f32 to vector<8x128xf32>
    %886 = arith.addf %883, %885 : vector<8x128xf32>
    %cst_223 = arith.constant 0.000000e+00 : f32
    %887 = vector.broadcast %cst_223 : f32 to vector<8x128xf32>
    %888 = arith.maximumf %886, %887 : vector<8x128xf32>
    %c73_224 = arith.constant 73 : index
    %889 = memref.load %arg3[%c73_224] : memref<100xf32, #tpu.memory_space<smem>>
    %890 = vector.broadcast %889 : f32 to vector<8x128xf32>
    %891 = arith.mulf %888, %890 : vector<8x128xf32>
    %892 = arith.addf %880, %891 : vector<8x128xf32>
    %c74 = arith.constant 74 : index
    %893 = memref.load %arg1[%c74] : memref<100xf32, #tpu.memory_space<smem>>
    %894 = vector.broadcast %893 : f32 to vector<8x128xf32>
    %895 = arith.mulf %0, %894 : vector<8x128xf32>
    %c74_225 = arith.constant 74 : index
    %896 = memref.load %arg2[%c74_225] : memref<100xf32, #tpu.memory_space<smem>>
    %897 = vector.broadcast %896 : f32 to vector<8x128xf32>
    %898 = arith.addf %895, %897 : vector<8x128xf32>
    %cst_226 = arith.constant 0.000000e+00 : f32
    %899 = vector.broadcast %cst_226 : f32 to vector<8x128xf32>
    %900 = arith.maximumf %898, %899 : vector<8x128xf32>
    %c74_227 = arith.constant 74 : index
    %901 = memref.load %arg3[%c74_227] : memref<100xf32, #tpu.memory_space<smem>>
    %902 = vector.broadcast %901 : f32 to vector<8x128xf32>
    %903 = arith.mulf %900, %902 : vector<8x128xf32>
    %904 = arith.addf %892, %903 : vector<8x128xf32>
    %c75 = arith.constant 75 : index
    %905 = memref.load %arg1[%c75] : memref<100xf32, #tpu.memory_space<smem>>
    %906 = vector.broadcast %905 : f32 to vector<8x128xf32>
    %907 = arith.mulf %0, %906 : vector<8x128xf32>
    %c75_228 = arith.constant 75 : index
    %908 = memref.load %arg2[%c75_228] : memref<100xf32, #tpu.memory_space<smem>>
    %909 = vector.broadcast %908 : f32 to vector<8x128xf32>
    %910 = arith.addf %907, %909 : vector<8x128xf32>
    %cst_229 = arith.constant 0.000000e+00 : f32
    %911 = vector.broadcast %cst_229 : f32 to vector<8x128xf32>
    %912 = arith.maximumf %910, %911 : vector<8x128xf32>
    %c75_230 = arith.constant 75 : index
    %913 = memref.load %arg3[%c75_230] : memref<100xf32, #tpu.memory_space<smem>>
    %914 = vector.broadcast %913 : f32 to vector<8x128xf32>
    %915 = arith.mulf %912, %914 : vector<8x128xf32>
    %916 = arith.addf %904, %915 : vector<8x128xf32>
    %c76 = arith.constant 76 : index
    %917 = memref.load %arg1[%c76] : memref<100xf32, #tpu.memory_space<smem>>
    %918 = vector.broadcast %917 : f32 to vector<8x128xf32>
    %919 = arith.mulf %0, %918 : vector<8x128xf32>
    %c76_231 = arith.constant 76 : index
    %920 = memref.load %arg2[%c76_231] : memref<100xf32, #tpu.memory_space<smem>>
    %921 = vector.broadcast %920 : f32 to vector<8x128xf32>
    %922 = arith.addf %919, %921 : vector<8x128xf32>
    %cst_232 = arith.constant 0.000000e+00 : f32
    %923 = vector.broadcast %cst_232 : f32 to vector<8x128xf32>
    %924 = arith.maximumf %922, %923 : vector<8x128xf32>
    %c76_233 = arith.constant 76 : index
    %925 = memref.load %arg3[%c76_233] : memref<100xf32, #tpu.memory_space<smem>>
    %926 = vector.broadcast %925 : f32 to vector<8x128xf32>
    %927 = arith.mulf %924, %926 : vector<8x128xf32>
    %928 = arith.addf %916, %927 : vector<8x128xf32>
    %c77 = arith.constant 77 : index
    %929 = memref.load %arg1[%c77] : memref<100xf32, #tpu.memory_space<smem>>
    %930 = vector.broadcast %929 : f32 to vector<8x128xf32>
    %931 = arith.mulf %0, %930 : vector<8x128xf32>
    %c77_234 = arith.constant 77 : index
    %932 = memref.load %arg2[%c77_234] : memref<100xf32, #tpu.memory_space<smem>>
    %933 = vector.broadcast %932 : f32 to vector<8x128xf32>
    %934 = arith.addf %931, %933 : vector<8x128xf32>
    %cst_235 = arith.constant 0.000000e+00 : f32
    %935 = vector.broadcast %cst_235 : f32 to vector<8x128xf32>
    %936 = arith.maximumf %934, %935 : vector<8x128xf32>
    %c77_236 = arith.constant 77 : index
    %937 = memref.load %arg3[%c77_236] : memref<100xf32, #tpu.memory_space<smem>>
    %938 = vector.broadcast %937 : f32 to vector<8x128xf32>
    %939 = arith.mulf %936, %938 : vector<8x128xf32>
    %940 = arith.addf %928, %939 : vector<8x128xf32>
    %c78 = arith.constant 78 : index
    %941 = memref.load %arg1[%c78] : memref<100xf32, #tpu.memory_space<smem>>
    %942 = vector.broadcast %941 : f32 to vector<8x128xf32>
    %943 = arith.mulf %0, %942 : vector<8x128xf32>
    %c78_237 = arith.constant 78 : index
    %944 = memref.load %arg2[%c78_237] : memref<100xf32, #tpu.memory_space<smem>>
    %945 = vector.broadcast %944 : f32 to vector<8x128xf32>
    %946 = arith.addf %943, %945 : vector<8x128xf32>
    %cst_238 = arith.constant 0.000000e+00 : f32
    %947 = vector.broadcast %cst_238 : f32 to vector<8x128xf32>
    %948 = arith.maximumf %946, %947 : vector<8x128xf32>
    %c78_239 = arith.constant 78 : index
    %949 = memref.load %arg3[%c78_239] : memref<100xf32, #tpu.memory_space<smem>>
    %950 = vector.broadcast %949 : f32 to vector<8x128xf32>
    %951 = arith.mulf %948, %950 : vector<8x128xf32>
    %952 = arith.addf %940, %951 : vector<8x128xf32>
    %c79 = arith.constant 79 : index
    %953 = memref.load %arg1[%c79] : memref<100xf32, #tpu.memory_space<smem>>
    %954 = vector.broadcast %953 : f32 to vector<8x128xf32>
    %955 = arith.mulf %0, %954 : vector<8x128xf32>
    %c79_240 = arith.constant 79 : index
    %956 = memref.load %arg2[%c79_240] : memref<100xf32, #tpu.memory_space<smem>>
    %957 = vector.broadcast %956 : f32 to vector<8x128xf32>
    %958 = arith.addf %955, %957 : vector<8x128xf32>
    %cst_241 = arith.constant 0.000000e+00 : f32
    %959 = vector.broadcast %cst_241 : f32 to vector<8x128xf32>
    %960 = arith.maximumf %958, %959 : vector<8x128xf32>
    %c79_242 = arith.constant 79 : index
    %961 = memref.load %arg3[%c79_242] : memref<100xf32, #tpu.memory_space<smem>>
    %962 = vector.broadcast %961 : f32 to vector<8x128xf32>
    %963 = arith.mulf %960, %962 : vector<8x128xf32>
    %964 = arith.addf %952, %963 : vector<8x128xf32>
    %c80 = arith.constant 80 : index
    %965 = memref.load %arg1[%c80] : memref<100xf32, #tpu.memory_space<smem>>
    %966 = vector.broadcast %965 : f32 to vector<8x128xf32>
    %967 = arith.mulf %0, %966 : vector<8x128xf32>
    %c80_243 = arith.constant 80 : index
    %968 = memref.load %arg2[%c80_243] : memref<100xf32, #tpu.memory_space<smem>>
    %969 = vector.broadcast %968 : f32 to vector<8x128xf32>
    %970 = arith.addf %967, %969 : vector<8x128xf32>
    %cst_244 = arith.constant 0.000000e+00 : f32
    %971 = vector.broadcast %cst_244 : f32 to vector<8x128xf32>
    %972 = arith.maximumf %970, %971 : vector<8x128xf32>
    %c80_245 = arith.constant 80 : index
    %973 = memref.load %arg3[%c80_245] : memref<100xf32, #tpu.memory_space<smem>>
    %974 = vector.broadcast %973 : f32 to vector<8x128xf32>
    %975 = arith.mulf %972, %974 : vector<8x128xf32>
    %976 = arith.addf %964, %975 : vector<8x128xf32>
    %c81 = arith.constant 81 : index
    %977 = memref.load %arg1[%c81] : memref<100xf32, #tpu.memory_space<smem>>
    %978 = vector.broadcast %977 : f32 to vector<8x128xf32>
    %979 = arith.mulf %0, %978 : vector<8x128xf32>
    %c81_246 = arith.constant 81 : index
    %980 = memref.load %arg2[%c81_246] : memref<100xf32, #tpu.memory_space<smem>>
    %981 = vector.broadcast %980 : f32 to vector<8x128xf32>
    %982 = arith.addf %979, %981 : vector<8x128xf32>
    %cst_247 = arith.constant 0.000000e+00 : f32
    %983 = vector.broadcast %cst_247 : f32 to vector<8x128xf32>
    %984 = arith.maximumf %982, %983 : vector<8x128xf32>
    %c81_248 = arith.constant 81 : index
    %985 = memref.load %arg3[%c81_248] : memref<100xf32, #tpu.memory_space<smem>>
    %986 = vector.broadcast %985 : f32 to vector<8x128xf32>
    %987 = arith.mulf %984, %986 : vector<8x128xf32>
    %988 = arith.addf %976, %987 : vector<8x128xf32>
    %c82 = arith.constant 82 : index
    %989 = memref.load %arg1[%c82] : memref<100xf32, #tpu.memory_space<smem>>
    %990 = vector.broadcast %989 : f32 to vector<8x128xf32>
    %991 = arith.mulf %0, %990 : vector<8x128xf32>
    %c82_249 = arith.constant 82 : index
    %992 = memref.load %arg2[%c82_249] : memref<100xf32, #tpu.memory_space<smem>>
    %993 = vector.broadcast %992 : f32 to vector<8x128xf32>
    %994 = arith.addf %991, %993 : vector<8x128xf32>
    %cst_250 = arith.constant 0.000000e+00 : f32
    %995 = vector.broadcast %cst_250 : f32 to vector<8x128xf32>
    %996 = arith.maximumf %994, %995 : vector<8x128xf32>
    %c82_251 = arith.constant 82 : index
    %997 = memref.load %arg3[%c82_251] : memref<100xf32, #tpu.memory_space<smem>>
    %998 = vector.broadcast %997 : f32 to vector<8x128xf32>
    %999 = arith.mulf %996, %998 : vector<8x128xf32>
    %1000 = arith.addf %988, %999 : vector<8x128xf32>
    %c83 = arith.constant 83 : index
    %1001 = memref.load %arg1[%c83] : memref<100xf32, #tpu.memory_space<smem>>
    %1002 = vector.broadcast %1001 : f32 to vector<8x128xf32>
    %1003 = arith.mulf %0, %1002 : vector<8x128xf32>
    %c83_252 = arith.constant 83 : index
    %1004 = memref.load %arg2[%c83_252] : memref<100xf32, #tpu.memory_space<smem>>
    %1005 = vector.broadcast %1004 : f32 to vector<8x128xf32>
    %1006 = arith.addf %1003, %1005 : vector<8x128xf32>
    %cst_253 = arith.constant 0.000000e+00 : f32
    %1007 = vector.broadcast %cst_253 : f32 to vector<8x128xf32>
    %1008 = arith.maximumf %1006, %1007 : vector<8x128xf32>
    %c83_254 = arith.constant 83 : index
    %1009 = memref.load %arg3[%c83_254] : memref<100xf32, #tpu.memory_space<smem>>
    %1010 = vector.broadcast %1009 : f32 to vector<8x128xf32>
    %1011 = arith.mulf %1008, %1010 : vector<8x128xf32>
    %1012 = arith.addf %1000, %1011 : vector<8x128xf32>
    %c84 = arith.constant 84 : index
    %1013 = memref.load %arg1[%c84] : memref<100xf32, #tpu.memory_space<smem>>
    %1014 = vector.broadcast %1013 : f32 to vector<8x128xf32>
    %1015 = arith.mulf %0, %1014 : vector<8x128xf32>
    %c84_255 = arith.constant 84 : index
    %1016 = memref.load %arg2[%c84_255] : memref<100xf32, #tpu.memory_space<smem>>
    %1017 = vector.broadcast %1016 : f32 to vector<8x128xf32>
    %1018 = arith.addf %1015, %1017 : vector<8x128xf32>
    %cst_256 = arith.constant 0.000000e+00 : f32
    %1019 = vector.broadcast %cst_256 : f32 to vector<8x128xf32>
    %1020 = arith.maximumf %1018, %1019 : vector<8x128xf32>
    %c84_257 = arith.constant 84 : index
    %1021 = memref.load %arg3[%c84_257] : memref<100xf32, #tpu.memory_space<smem>>
    %1022 = vector.broadcast %1021 : f32 to vector<8x128xf32>
    %1023 = arith.mulf %1020, %1022 : vector<8x128xf32>
    %1024 = arith.addf %1012, %1023 : vector<8x128xf32>
    %c85 = arith.constant 85 : index
    %1025 = memref.load %arg1[%c85] : memref<100xf32, #tpu.memory_space<smem>>
    %1026 = vector.broadcast %1025 : f32 to vector<8x128xf32>
    %1027 = arith.mulf %0, %1026 : vector<8x128xf32>
    %c85_258 = arith.constant 85 : index
    %1028 = memref.load %arg2[%c85_258] : memref<100xf32, #tpu.memory_space<smem>>
    %1029 = vector.broadcast %1028 : f32 to vector<8x128xf32>
    %1030 = arith.addf %1027, %1029 : vector<8x128xf32>
    %cst_259 = arith.constant 0.000000e+00 : f32
    %1031 = vector.broadcast %cst_259 : f32 to vector<8x128xf32>
    %1032 = arith.maximumf %1030, %1031 : vector<8x128xf32>
    %c85_260 = arith.constant 85 : index
    %1033 = memref.load %arg3[%c85_260] : memref<100xf32, #tpu.memory_space<smem>>
    %1034 = vector.broadcast %1033 : f32 to vector<8x128xf32>
    %1035 = arith.mulf %1032, %1034 : vector<8x128xf32>
    %1036 = arith.addf %1024, %1035 : vector<8x128xf32>
    %c86 = arith.constant 86 : index
    %1037 = memref.load %arg1[%c86] : memref<100xf32, #tpu.memory_space<smem>>
    %1038 = vector.broadcast %1037 : f32 to vector<8x128xf32>
    %1039 = arith.mulf %0, %1038 : vector<8x128xf32>
    %c86_261 = arith.constant 86 : index
    %1040 = memref.load %arg2[%c86_261] : memref<100xf32, #tpu.memory_space<smem>>
    %1041 = vector.broadcast %1040 : f32 to vector<8x128xf32>
    %1042 = arith.addf %1039, %1041 : vector<8x128xf32>
    %cst_262 = arith.constant 0.000000e+00 : f32
    %1043 = vector.broadcast %cst_262 : f32 to vector<8x128xf32>
    %1044 = arith.maximumf %1042, %1043 : vector<8x128xf32>
    %c86_263 = arith.constant 86 : index
    %1045 = memref.load %arg3[%c86_263] : memref<100xf32, #tpu.memory_space<smem>>
    %1046 = vector.broadcast %1045 : f32 to vector<8x128xf32>
    %1047 = arith.mulf %1044, %1046 : vector<8x128xf32>
    %1048 = arith.addf %1036, %1047 : vector<8x128xf32>
    %c87 = arith.constant 87 : index
    %1049 = memref.load %arg1[%c87] : memref<100xf32, #tpu.memory_space<smem>>
    %1050 = vector.broadcast %1049 : f32 to vector<8x128xf32>
    %1051 = arith.mulf %0, %1050 : vector<8x128xf32>
    %c87_264 = arith.constant 87 : index
    %1052 = memref.load %arg2[%c87_264] : memref<100xf32, #tpu.memory_space<smem>>
    %1053 = vector.broadcast %1052 : f32 to vector<8x128xf32>
    %1054 = arith.addf %1051, %1053 : vector<8x128xf32>
    %cst_265 = arith.constant 0.000000e+00 : f32
    %1055 = vector.broadcast %cst_265 : f32 to vector<8x128xf32>
    %1056 = arith.maximumf %1054, %1055 : vector<8x128xf32>
    %c87_266 = arith.constant 87 : index
    %1057 = memref.load %arg3[%c87_266] : memref<100xf32, #tpu.memory_space<smem>>
    %1058 = vector.broadcast %1057 : f32 to vector<8x128xf32>
    %1059 = arith.mulf %1056, %1058 : vector<8x128xf32>
    %1060 = arith.addf %1048, %1059 : vector<8x128xf32>
    %c88 = arith.constant 88 : index
    %1061 = memref.load %arg1[%c88] : memref<100xf32, #tpu.memory_space<smem>>
    %1062 = vector.broadcast %1061 : f32 to vector<8x128xf32>
    %1063 = arith.mulf %0, %1062 : vector<8x128xf32>
    %c88_267 = arith.constant 88 : index
    %1064 = memref.load %arg2[%c88_267] : memref<100xf32, #tpu.memory_space<smem>>
    %1065 = vector.broadcast %1064 : f32 to vector<8x128xf32>
    %1066 = arith.addf %1063, %1065 : vector<8x128xf32>
    %cst_268 = arith.constant 0.000000e+00 : f32
    %1067 = vector.broadcast %cst_268 : f32 to vector<8x128xf32>
    %1068 = arith.maximumf %1066, %1067 : vector<8x128xf32>
    %c88_269 = arith.constant 88 : index
    %1069 = memref.load %arg3[%c88_269] : memref<100xf32, #tpu.memory_space<smem>>
    %1070 = vector.broadcast %1069 : f32 to vector<8x128xf32>
    %1071 = arith.mulf %1068, %1070 : vector<8x128xf32>
    %1072 = arith.addf %1060, %1071 : vector<8x128xf32>
    %c89 = arith.constant 89 : index
    %1073 = memref.load %arg1[%c89] : memref<100xf32, #tpu.memory_space<smem>>
    %1074 = vector.broadcast %1073 : f32 to vector<8x128xf32>
    %1075 = arith.mulf %0, %1074 : vector<8x128xf32>
    %c89_270 = arith.constant 89 : index
    %1076 = memref.load %arg2[%c89_270] : memref<100xf32, #tpu.memory_space<smem>>
    %1077 = vector.broadcast %1076 : f32 to vector<8x128xf32>
    %1078 = arith.addf %1075, %1077 : vector<8x128xf32>
    %cst_271 = arith.constant 0.000000e+00 : f32
    %1079 = vector.broadcast %cst_271 : f32 to vector<8x128xf32>
    %1080 = arith.maximumf %1078, %1079 : vector<8x128xf32>
    %c89_272 = arith.constant 89 : index
    %1081 = memref.load %arg3[%c89_272] : memref<100xf32, #tpu.memory_space<smem>>
    %1082 = vector.broadcast %1081 : f32 to vector<8x128xf32>
    %1083 = arith.mulf %1080, %1082 : vector<8x128xf32>
    %1084 = arith.addf %1072, %1083 : vector<8x128xf32>
    %c90 = arith.constant 90 : index
    %1085 = memref.load %arg1[%c90] : memref<100xf32, #tpu.memory_space<smem>>
    %1086 = vector.broadcast %1085 : f32 to vector<8x128xf32>
    %1087 = arith.mulf %0, %1086 : vector<8x128xf32>
    %c90_273 = arith.constant 90 : index
    %1088 = memref.load %arg2[%c90_273] : memref<100xf32, #tpu.memory_space<smem>>
    %1089 = vector.broadcast %1088 : f32 to vector<8x128xf32>
    %1090 = arith.addf %1087, %1089 : vector<8x128xf32>
    %cst_274 = arith.constant 0.000000e+00 : f32
    %1091 = vector.broadcast %cst_274 : f32 to vector<8x128xf32>
    %1092 = arith.maximumf %1090, %1091 : vector<8x128xf32>
    %c90_275 = arith.constant 90 : index
    %1093 = memref.load %arg3[%c90_275] : memref<100xf32, #tpu.memory_space<smem>>
    %1094 = vector.broadcast %1093 : f32 to vector<8x128xf32>
    %1095 = arith.mulf %1092, %1094 : vector<8x128xf32>
    %1096 = arith.addf %1084, %1095 : vector<8x128xf32>
    %c91 = arith.constant 91 : index
    %1097 = memref.load %arg1[%c91] : memref<100xf32, #tpu.memory_space<smem>>
    %1098 = vector.broadcast %1097 : f32 to vector<8x128xf32>
    %1099 = arith.mulf %0, %1098 : vector<8x128xf32>
    %c91_276 = arith.constant 91 : index
    %1100 = memref.load %arg2[%c91_276] : memref<100xf32, #tpu.memory_space<smem>>
    %1101 = vector.broadcast %1100 : f32 to vector<8x128xf32>
    %1102 = arith.addf %1099, %1101 : vector<8x128xf32>
    %cst_277 = arith.constant 0.000000e+00 : f32
    %1103 = vector.broadcast %cst_277 : f32 to vector<8x128xf32>
    %1104 = arith.maximumf %1102, %1103 : vector<8x128xf32>
    %c91_278 = arith.constant 91 : index
    %1105 = memref.load %arg3[%c91_278] : memref<100xf32, #tpu.memory_space<smem>>
    %1106 = vector.broadcast %1105 : f32 to vector<8x128xf32>
    %1107 = arith.mulf %1104, %1106 : vector<8x128xf32>
    %1108 = arith.addf %1096, %1107 : vector<8x128xf32>
    %c92 = arith.constant 92 : index
    %1109 = memref.load %arg1[%c92] : memref<100xf32, #tpu.memory_space<smem>>
    %1110 = vector.broadcast %1109 : f32 to vector<8x128xf32>
    %1111 = arith.mulf %0, %1110 : vector<8x128xf32>
    %c92_279 = arith.constant 92 : index
    %1112 = memref.load %arg2[%c92_279] : memref<100xf32, #tpu.memory_space<smem>>
    %1113 = vector.broadcast %1112 : f32 to vector<8x128xf32>
    %1114 = arith.addf %1111, %1113 : vector<8x128xf32>
    %cst_280 = arith.constant 0.000000e+00 : f32
    %1115 = vector.broadcast %cst_280 : f32 to vector<8x128xf32>
    %1116 = arith.maximumf %1114, %1115 : vector<8x128xf32>
    %c92_281 = arith.constant 92 : index
    %1117 = memref.load %arg3[%c92_281] : memref<100xf32, #tpu.memory_space<smem>>
    %1118 = vector.broadcast %1117 : f32 to vector<8x128xf32>
    %1119 = arith.mulf %1116, %1118 : vector<8x128xf32>
    %1120 = arith.addf %1108, %1119 : vector<8x128xf32>
    %c93 = arith.constant 93 : index
    %1121 = memref.load %arg1[%c93] : memref<100xf32, #tpu.memory_space<smem>>
    %1122 = vector.broadcast %1121 : f32 to vector<8x128xf32>
    %1123 = arith.mulf %0, %1122 : vector<8x128xf32>
    %c93_282 = arith.constant 93 : index
    %1124 = memref.load %arg2[%c93_282] : memref<100xf32, #tpu.memory_space<smem>>
    %1125 = vector.broadcast %1124 : f32 to vector<8x128xf32>
    %1126 = arith.addf %1123, %1125 : vector<8x128xf32>
    %cst_283 = arith.constant 0.000000e+00 : f32
    %1127 = vector.broadcast %cst_283 : f32 to vector<8x128xf32>
    %1128 = arith.maximumf %1126, %1127 : vector<8x128xf32>
    %c93_284 = arith.constant 93 : index
    %1129 = memref.load %arg3[%c93_284] : memref<100xf32, #tpu.memory_space<smem>>
    %1130 = vector.broadcast %1129 : f32 to vector<8x128xf32>
    %1131 = arith.mulf %1128, %1130 : vector<8x128xf32>
    %1132 = arith.addf %1120, %1131 : vector<8x128xf32>
    %c94 = arith.constant 94 : index
    %1133 = memref.load %arg1[%c94] : memref<100xf32, #tpu.memory_space<smem>>
    %1134 = vector.broadcast %1133 : f32 to vector<8x128xf32>
    %1135 = arith.mulf %0, %1134 : vector<8x128xf32>
    %c94_285 = arith.constant 94 : index
    %1136 = memref.load %arg2[%c94_285] : memref<100xf32, #tpu.memory_space<smem>>
    %1137 = vector.broadcast %1136 : f32 to vector<8x128xf32>
    %1138 = arith.addf %1135, %1137 : vector<8x128xf32>
    %cst_286 = arith.constant 0.000000e+00 : f32
    %1139 = vector.broadcast %cst_286 : f32 to vector<8x128xf32>
    %1140 = arith.maximumf %1138, %1139 : vector<8x128xf32>
    %c94_287 = arith.constant 94 : index
    %1141 = memref.load %arg3[%c94_287] : memref<100xf32, #tpu.memory_space<smem>>
    %1142 = vector.broadcast %1141 : f32 to vector<8x128xf32>
    %1143 = arith.mulf %1140, %1142 : vector<8x128xf32>
    %1144 = arith.addf %1132, %1143 : vector<8x128xf32>
    %c95 = arith.constant 95 : index
    %1145 = memref.load %arg1[%c95] : memref<100xf32, #tpu.memory_space<smem>>
    %1146 = vector.broadcast %1145 : f32 to vector<8x128xf32>
    %1147 = arith.mulf %0, %1146 : vector<8x128xf32>
    %c95_288 = arith.constant 95 : index
    %1148 = memref.load %arg2[%c95_288] : memref<100xf32, #tpu.memory_space<smem>>
    %1149 = vector.broadcast %1148 : f32 to vector<8x128xf32>
    %1150 = arith.addf %1147, %1149 : vector<8x128xf32>
    %cst_289 = arith.constant 0.000000e+00 : f32
    %1151 = vector.broadcast %cst_289 : f32 to vector<8x128xf32>
    %1152 = arith.maximumf %1150, %1151 : vector<8x128xf32>
    %c95_290 = arith.constant 95 : index
    %1153 = memref.load %arg3[%c95_290] : memref<100xf32, #tpu.memory_space<smem>>
    %1154 = vector.broadcast %1153 : f32 to vector<8x128xf32>
    %1155 = arith.mulf %1152, %1154 : vector<8x128xf32>
    %1156 = arith.addf %1144, %1155 : vector<8x128xf32>
    %c96 = arith.constant 96 : index
    %1157 = memref.load %arg1[%c96] : memref<100xf32, #tpu.memory_space<smem>>
    %1158 = vector.broadcast %1157 : f32 to vector<8x128xf32>
    %1159 = arith.mulf %0, %1158 : vector<8x128xf32>
    %c96_291 = arith.constant 96 : index
    %1160 = memref.load %arg2[%c96_291] : memref<100xf32, #tpu.memory_space<smem>>
    %1161 = vector.broadcast %1160 : f32 to vector<8x128xf32>
    %1162 = arith.addf %1159, %1161 : vector<8x128xf32>
    %cst_292 = arith.constant 0.000000e+00 : f32
    %1163 = vector.broadcast %cst_292 : f32 to vector<8x128xf32>
    %1164 = arith.maximumf %1162, %1163 : vector<8x128xf32>
    %c96_293 = arith.constant 96 : index
    %1165 = memref.load %arg3[%c96_293] : memref<100xf32, #tpu.memory_space<smem>>
    %1166 = vector.broadcast %1165 : f32 to vector<8x128xf32>
    %1167 = arith.mulf %1164, %1166 : vector<8x128xf32>
    %1168 = arith.addf %1156, %1167 : vector<8x128xf32>
    %c97 = arith.constant 97 : index
    %1169 = memref.load %arg1[%c97] : memref<100xf32, #tpu.memory_space<smem>>
    %1170 = vector.broadcast %1169 : f32 to vector<8x128xf32>
    %1171 = arith.mulf %0, %1170 : vector<8x128xf32>
    %c97_294 = arith.constant 97 : index
    %1172 = memref.load %arg2[%c97_294] : memref<100xf32, #tpu.memory_space<smem>>
    %1173 = vector.broadcast %1172 : f32 to vector<8x128xf32>
    %1174 = arith.addf %1171, %1173 : vector<8x128xf32>
    %cst_295 = arith.constant 0.000000e+00 : f32
    %1175 = vector.broadcast %cst_295 : f32 to vector<8x128xf32>
    %1176 = arith.maximumf %1174, %1175 : vector<8x128xf32>
    %c97_296 = arith.constant 97 : index
    %1177 = memref.load %arg3[%c97_296] : memref<100xf32, #tpu.memory_space<smem>>
    %1178 = vector.broadcast %1177 : f32 to vector<8x128xf32>
    %1179 = arith.mulf %1176, %1178 : vector<8x128xf32>
    %1180 = arith.addf %1168, %1179 : vector<8x128xf32>
    %c98 = arith.constant 98 : index
    %1181 = memref.load %arg1[%c98] : memref<100xf32, #tpu.memory_space<smem>>
    %1182 = vector.broadcast %1181 : f32 to vector<8x128xf32>
    %1183 = arith.mulf %0, %1182 : vector<8x128xf32>
    %c98_297 = arith.constant 98 : index
    %1184 = memref.load %arg2[%c98_297] : memref<100xf32, #tpu.memory_space<smem>>
    %1185 = vector.broadcast %1184 : f32 to vector<8x128xf32>
    %1186 = arith.addf %1183, %1185 : vector<8x128xf32>
    %cst_298 = arith.constant 0.000000e+00 : f32
    %1187 = vector.broadcast %cst_298 : f32 to vector<8x128xf32>
    %1188 = arith.maximumf %1186, %1187 : vector<8x128xf32>
    %c98_299 = arith.constant 98 : index
    %1189 = memref.load %arg3[%c98_299] : memref<100xf32, #tpu.memory_space<smem>>
    %1190 = vector.broadcast %1189 : f32 to vector<8x128xf32>
    %1191 = arith.mulf %1188, %1190 : vector<8x128xf32>
    %1192 = arith.addf %1180, %1191 : vector<8x128xf32>
    %c99 = arith.constant 99 : index
    %1193 = memref.load %arg1[%c99] : memref<100xf32, #tpu.memory_space<smem>>
    %1194 = vector.broadcast %1193 : f32 to vector<8x128xf32>
    %1195 = arith.mulf %0, %1194 : vector<8x128xf32>
    %c99_300 = arith.constant 99 : index
    %1196 = memref.load %arg2[%c99_300] : memref<100xf32, #tpu.memory_space<smem>>
    %1197 = vector.broadcast %1196 : f32 to vector<8x128xf32>
    %1198 = arith.addf %1195, %1197 : vector<8x128xf32>
    %cst_301 = arith.constant 0.000000e+00 : f32
    %1199 = vector.broadcast %cst_301 : f32 to vector<8x128xf32>
    %1200 = arith.maximumf %1198, %1199 : vector<8x128xf32>
    %c99_302 = arith.constant 99 : index
    %1201 = memref.load %arg3[%c99_302] : memref<100xf32, #tpu.memory_space<smem>>
    %1202 = vector.broadcast %1201 : f32 to vector<8x128xf32>
    %1203 = arith.mulf %1200, %1202 : vector<8x128xf32>
    %1204 = arith.addf %1192, %1203 : vector<8x128xf32>
    %1205 = arith.negf %1204 : vector<8x128xf32>
    %1206 = math.exp %1205 : vector<8x128xf32>
    %cst_303 = arith.constant 1.000000e+00 : f32
    %1207 = vector.broadcast %cst_303 : f32 to vector<8x128xf32>
    %1208 = arith.addf %1207, %1206 : vector<8x128xf32>
    %1209 = arith.divf %1207, %1208 : vector<8x128xf32>
    %c0_304 = arith.constant 0 : index
    %c0_305 = arith.constant 0 : index
    %1210 = vector.load %arg6[%c0_304, %c0_305] : memref<8x128xf32, #tpu.memory_space<vmem>>, vector<8x128xf32>
    tpu.vector_store %arg6[%c0_304, %c0_305], %1209 {strides = array<i32>} : memref<8x128xf32, #tpu.memory_space<vmem>>, vector<8x128xf32>,
    return
  }
  func.func @transform_0(%arg0: i32) -> i32 {
    %c0_i32 = arith.constant 0 : i32
    %c0_i32_0 = arith.constant 0 : i32
    return %c0_i32 : i32
  }
  func.func @transform_1(%arg0: i32) -> i32 {
    %c0_i32 = arith.constant 0 : i32
    %c0_i32_0 = arith.constant 0 : i32
    return %c0_i32 : i32
  }
  func.func @transform_2(%arg0: i32) -> i32 {
    %c0_i32 = arith.constant 0 : i32
    %c0_i32_0 = arith.constant 0 : i32
    return %c0_i32 : i32
  }
  func.func @transform_3(%arg0: i32) -> i32 {
    %c0_i32 = arith.constant 0 : i32
    %c0_i32_0 = arith.constant 0 : i32
    return %c0_i32 : i32
  }
  func.func @transform_4(%arg0: i32) -> (i32, i32) {
    %c0_i32 = arith.constant 0 : i32
    %c0_i32_0 = arith.constant 0 : i32
    return %arg0, %c0_i32 : i32, i32
  }
  func.func @transform_5(%arg0: i32) -> (i32, i32) {
    %c0_i32 = arith.constant 0 : i32
    %c0_i32_0 = arith.constant 0 : i32
    return %arg0, %c0_i32 : i32, i32
  }
}

</mosaic_0001>

<llo_original>
// kernel: tpu_custom_call.1
$region0: #{tpu_custom_call.1}
  #allocation0 [shape = 'u32[]', space=smem, size = 0x4, offset = 0x4, fixed_abs, tag = 'smem constant byte address 0x4 - core index']
  #allocation1 [shape = 'u32[72,128]{1,0:T(1,128)}', space=vmem, size = 0x9000, scoped, tag = 'internal scratch']
  #allocation2 [shape = 'f32[1]{0:T(128)S(6)}', space=smem, size = 0x200, scoped, tag = 'scoped memory for tpu_custom_call.1']
  %s0 = inlined_call_operand.vmem [shape: f32[100], index: 0, kind: input, shape index: {}]
  %s1 = inlined_call_operand.vmem [shape: f32[100], index: 1, kind: input, shape index: {}]
  %s2 = inlined_call_operand.vmem [shape: f32[100], index: 2, kind: input, shape index: {}]
  %s3 = inlined_call_operand.<no memory space> [shape: f32[1], index: 3, kind: input, shape index: {}]
  %s4 = inlined_call_operand.hbm [shape: f32[8,128], index: 4, kind: input, shape index: {}]
  %s5 = inlined_call_operand.hbm [shape: f32[8,128], index: 5, kind: output, shape index: {}]
  %s6 = sld [smem:[#allocation0]]
  $region46: #{tpu_custom_call.1} parent=0
    _
  %s8 = ssub.s32 1, %s6
  %s9 = scalar_select 0, %s8, %s6
  %10 = sst [smem:[#allocation2]] %s3
  $region1: #{tpu_custom_call.1} parent=0
    #allocation3 [shape = 'u8[512]{0}', space=smem, size = 0x200, scoped, tag = 'input window, operand 0, single buffered']
    #allocation4 [shape = 's32[1]{0}', space=sflag, size = 0x4, scoped, tag = 'scoped memory for tpu_custom_call.1']
    #allocation5 [shape = 's32[1]{0}', space=sflag, size = 0x4, scoped, tag = 'scoped memory for tpu_custom_call.1']
    #allocation6 [shape = 's32[1]{0}', space=sflag, size = 0x4, scoped, tag = 'scoped memory for tpu_custom_call.1']
    #allocation7 [shape = 'u8[512]{0}', space=smem, size = 0x200, scoped, tag = 'input window, operand 1, single buffered']
    #allocation8 [shape = 's32[1]{0}', space=sflag, size = 0x4, scoped, tag = 'scoped memory for tpu_custom_call.1']
    #allocation9 [shape = 'u8[512]{0}', space=smem, size = 0x200, scoped, tag = 'input window, operand 2, single buffered']
    #allocation10 [shape = 'u8[4096]{0}', space=vmem, size = 0x1000, scoped, tag = 'input window, operand 4, single buffered']
    #allocation11 [shape = 'u8[4096]{0}', space=vmem, size = 0x1000, scoped, tag = 'output window, operand 0, single buffered']
    %11 = vsyncpa [#allocation6], 0
    %12 = vsyncpa [#allocation8], 0
    %13 = vsyncpa [#allocation4], 0
    %14 = vsyncpa [#allocation5], 0
    // Predicated region
    $region2: #{tpu_custom_call.1} parent=1 // pred_check
      _
    $region3: #{tpu_custom_call.1} parent=1 // pred_check_branch
      %16 = sbr.rel (0) target = $region5
    $region4: #{tpu_custom_call.1} parent=1 // pred_region
      %18 = vsyncadd [#allocation6], 0
      %s20 = sshll.u32 %s0, 4
      %s21 = int_to_ptr.vmem [resolvable:$true] %s20
      %23 = dma.vmem_to_smem %s21, 16, [#allocation3], [#allocation6]
    $region5: #{tpu_custom_call.1} parent=1 // pred_fallthru
      _
    // Predicated region
    $region6: #{tpu_custom_call.1} parent=1 // pred_check
      _
    $region7: #{tpu_custom_call.1} parent=1 // pred_check_branch
      %25 = sbr.rel (0) target = $region9
    $region8: #{tpu_custom_call.1} parent=1 // pred_region
      %27 = vsyncadd [#allocation8], 0
      %s29 = sshll.u32 %s1, 4
      %s30 = int_to_ptr.vmem [resolvable:$true] %s29
      %32 = dma.vmem_to_smem %s30, 16, [#allocation7], [#allocation8]
    $region9: #{tpu_custom_call.1} parent=1 // pred_fallthru
      _
    // Predicated region
    $region10: #{tpu_custom_call.1} parent=1 // pred_check
      _
    $region11: #{tpu_custom_call.1} parent=1 // pred_check_branch
      %34 = sbr.rel (0) target = $region13
    $region12: #{tpu_custom_call.1} parent=1 // pred_region
      %36 = vsyncadd [#allocation8], 0
      %s38 = sshll.u32 %s2, 4
      %s39 = int_to_ptr.vmem [resolvable:$true] %s38
      %41 = dma.vmem_to_smem %s39, 16, [#allocation9], [#allocation8]
    $region13: #{tpu_custom_call.1} parent=1 // pred_fallthru
      _
    // Predicated region
    $region14: #{tpu_custom_call.1} parent=1 // pred_check
      _
    $region15: #{tpu_custom_call.1} parent=1 // pred_check_branch
      %43 = sbr.rel (0) target = $region17
    $region16: #{tpu_custom_call.1} parent=1 // pred_region
      _
    $region17: #{tpu_custom_call.1} parent=1 // pred_fallthru
      _
    // Predicated region
    $region18: #{tpu_custom_call.1} parent=1 // pred_check
      _
    $region19: #{tpu_custom_call.1} parent=1 // pred_check_branch
      %45 = sbr.rel (0) target = $region21
    $region20: #{tpu_custom_call.1} parent=1 // pred_region
      %47 = vsyncadd [#allocation4], 0
      %s49 = sshll.u32 %s4, 4
      %s50 = int_to_ptr.hbm [resolvable:$true] %s49
      %s51 = sshll.u32 [#allocation10], 4
      %s52 = int_to_ptr.vmem [resolvable:$true] %s51
      %54 = dma.hbm_to_vmem [thread:$0]  %s50, 128, %s52, [#allocation4]
    $region21: #{tpu_custom_call.1} parent=1 // pred_fallthru
      _
    // Predicated region
    $region22: #{tpu_custom_call.1} parent=1 // pred_check
      _
    $region23: #{tpu_custom_call.1} parent=1 // pred_check_branch
      %56 = sbr.rel (0) target = $region25
    $region24: #{tpu_custom_call.1} parent=1 // pred_region
      %58 = dma.done [#allocation6], 16
    $region25: #{tpu_custom_call.1} parent=1 // pred_fallthru
      _
    // Predicated region
    $region26: #{tpu_custom_call.1} parent=1 // pred_check
      _
    $region27: #{tpu_custom_call.1} parent=1 // pred_check_branch
      %60 = sbr.rel (0) target = $region29
    $region28: #{tpu_custom_call.1} parent=1 // pred_region
      %62 = dma.done [#allocation8], 16
    $region29: #{tpu_custom_call.1} parent=1 // pred_fallthru
      _
    // Predicated region
    $region30: #{tpu_custom_call.1} parent=1 // pred_check
      _
    $region31: #{tpu_custom_call.1} parent=1 // pred_check_branch
      %64 = sbr.rel (0) target = $region33
    $region32: #{tpu_custom_call.1} parent=1 // pred_region
      %66 = dma.done [#allocation8], 16
    $region33: #{tpu_custom_call.1} parent=1 // pred_fallthru
      _
    // Predicated region
    $region34: #{tpu_custom_call.1} parent=1 // pred_check
      _
    $region35: #{tpu_custom_call.1} parent=1 // pred_check_branch
      %68 = sbr.rel (0) target = $region37
    $region36: #{tpu_custom_call.1} parent=1 // pred_region
      %70 = dma.done [#allocation4], 128
    $region37: #{tpu_custom_call.1} parent=1 // pred_fallthru
      _
    %71 = sfence
    %v72 = vld [vmem:[#allocation10] sm:$0xff]
    %s73 = sld [smem:[#allocation2]]
    %v74 = vstv %s73
    %v75 = vadd.f32 %v74, 0.0
    %s76 = sld [smem:[#allocation3]]
    %v77 = vstv %s76
    %v78 = vmul.f32 %v72, %v77
    %s79 = sld [smem:[#allocation7]]
    %v80 = vstv %s79
    %v81 = vadd.f32 %v78, %v80
    %v82 = vmax.f32 %v81, 0.0
    %s83 = sld [smem:[#allocation9]]
    %v84 = vstv %s83
    %v85 = vmul.f32 %v82, %v84
    %v86 = vadd.f32 %v75, %v85
    %s87 = sld [smem:[#allocation3 + $0x1]]
    %v88 = vstv %s87
    %v89 = vmul.f32 %v72, %v88
    %s90 = sld [smem:[#allocation7 + $0x1]]
    %v91 = vstv %s90
    %v92 = vadd.f32 %v89, %v91
    %v93 = vmax.f32 %v92, 0.0
    %s94 = sld [smem:[#allocation9 + $0x1]]
    %v95 = vstv %s94
    %v96 = vmul.f32 %v93, %v95
    %v97 = vadd.f32 %v86, %v96
    %s98 = sld [smem:[#allocation3 + $0x2]]
    %v99 = vstv %s98
    %v100 = vmul.f32 %v72, %v99
    %s101 = sld [smem:[#allocation7 + $0x2]]
    %v102 = vstv %s101
    %v103 = vadd.f32 %v100, %v102
    %v104 = vmax.f32 %v103, 0.0
    %s105 = sld [smem:[#allocation9 + $0x2]]
    %v106 = vstv %s105
    %v107 = vmul.f32 %v104, %v106
    %v108 = vadd.f32 %v97, %v107
    %s109 = sld [smem:[#allocation3 + $0x3]]
    %v110 = vstv %s109
    %v111 = vmul.f32 %v72, %v110
    %s112 = sld [smem:[#allocation7 + $0x3]]
    %v113 = vstv %s112
    %v114 = vadd.f32 %v111, %v113
    %v115 = vmax.f32 %v114, 0.0
    %s116 = sld [smem:[#allocation9 + $0x3]]
    %v117 = vstv %s116
    %v118 = vmul.f32 %v115, %v117
    %v119 = vadd.f32 %v108, %v118
    %s120 = sld [smem:[#allocation3 + $0x4]]
    %v121 = vstv %s120
    %v122 = vmul.f32 %v72, %v121
    %s123 = sld [smem:[#allocation7 + $0x4]]
    %v124 = vstv %s123
    %v125 = vadd.f32 %v122, %v124
    %v126 = vmax.f32 %v125, 0.0
    %s127 = sld [smem:[#allocation9 + $0x4]]
    %v128 = vstv %s127
    %v129 = vmul.f32 %v126, %v128
    %v130 = vadd.f32 %v119, %v129
    %s131 = sld [smem:[#allocation3 + $0x5]]
    %v132 = vstv %s131
    %v133 = vmul.f32 %v72, %v132
    %s134 = sld [smem:[#allocation7 + $0x5]]
    %v135 = vstv %s134
    %v136 = vadd.f32 %v133, %v135
    %v137 = vmax.f32 %v136, 0.0
    %s138 = sld [smem:[#allocation9 + $0x5]]
    %v139 = vstv %s138
    %v140 = vmul.f32 %v137, %v139
    %v141 = vadd.f32 %v130, %v140
    %s142 = sld [smem:[#allocation3 + $0x6]]
    %v143 = vstv %s142
    %v144 = vmul.f32 %v72, %v143
    %s145 = sld [smem:[#allocation7 + $0x6]]
    %v146 = vstv %s145
    %v147 = vadd.f32 %v144, %v146
    %v148 = vmax.f32 %v147, 0.0
    %s149 = sld [smem:[#allocation9 + $0x6]]
    %v150 = vstv %s149
    %v151 = vmul.f32 %v148, %v150
    %v152 = vadd.f32 %v141, %v151
    %s153 = sld [smem:[#allocation3 + $0x7]]
    %v154 = vstv %s153
    %v155 = vmul.f32 %v72, %v154
    %s156 = sld [smem:[#allocation7 + $0x7]]
    %v157 = vstv %s156
    %v158 = vadd.f32 %v155, %v157
    %v159 = vmax.f32 %v158, 0.0
    %s160 = sld [smem:[#allocation9 + $0x7]]
    %v161 = vstv %s160
    %v162 = vmul.f32 %v159, %v161
    %v163 = vadd.f32 %v152, %v162
    %s164 = sld [smem:[#allocation3 + $0x8]]
    %v165 = vstv %s164
    %v166 = vmul.f32 %v72, %v165
    %s167 = sld [smem:[#allocation7 + $0x8]]
    %v168 = vstv %s167
    %v169 = vadd.f32 %v166, %v168
    %v170 = vmax.f32 %v169, 0.0
    %s171 = sld [smem:[#allocation9 + $0x8]]
    %v172 = vstv %s171
    %v173 = vmul.f32 %v170, %v172
    %v174 = vadd.f32 %v163, %v173
    %s175 = sld [smem:[#allocation3 + $0x9]]
    %v176 = vstv %s175
    %v177 = vmul.f32 %v72, %v176
    %s178 = sld [smem:[#allocation7 + $0x9]]
    %v179 = vstv %s178
    %v180 = vadd.f32 %v177, %v179
    %v181 = vmax.f32 %v180, 0.0
    %s182 = sld [smem:[#allocation9 + $0x9]]
    %v183 = vstv %s182
    %v184 = vmul.f32 %v181, %v183
    %v185 = vadd.f32 %v174, %v184
    %s186 = sld [smem:[#allocation3 + $0xa]]
    %v187 = vstv %s186
    %v188 = vmul.f32 %v72, %v187
    %s189 = sld [smem:[#allocation7 + $0xa]]
    %v190 = vstv %s189
    %v191 = vadd.f32 %v188, %v190
    %v192 = vmax.f32 %v191, 0.0
    %s193 = sld [smem:[#allocation9 + $0xa]]
    %v194 = vstv %s193
    %v195 = vmul.f32 %v192, %v194
    %v196 = vadd.f32 %v185, %v195
    %s197 = sld [smem:[#allocation3 + $0xb]]
    %v198 = vstv %s197
    %v199 = vmul.f32 %v72, %v198
    %s200 = sld [smem:[#allocation7 + $0xb]]
    %v201 = vstv %s200
    %v202 = vadd.f32 %v199, %v201
    %v203 = vmax.f32 %v202, 0.0
    %s204 = sld [smem:[#allocation9 + $0xb]]
    %v205 = vstv %s204
    %v206 = vmul.f32 %v203, %v205
    %v207 = vadd.f32 %v196, %v206
    %s208 = sld [smem:[#allocation3 + $0xc]]
    %v209 = vstv %s208
    %v210 = vmul.f32 %v72, %v209
    %s211 = sld [smem:[#allocation7 + $0xc]]
    %v212 = vstv %s211
    %v213 = vadd.f32 %v210, %v212
    %v214 = vmax.f32 %v213, 0.0
    %s215 = sld [smem:[#allocation9 + $0xc]]
    %v216 = vstv %s215
    %v217 = vmul.f32 %v214, %v216
    %v218 = vadd.f32 %v207, %v217
    %s219 = sld [smem:[#allocation3 + $0xd]]
    %v220 = vstv %s219
    %v221 = vmul.f32 %v72, %v220
    %s222 = sld [smem:[#allocation7 + $0xd]]
    %v223 = vstv %s222
    %v224 = vadd.f32 %v221, %v223
    %v225 = vmax.f32 %v224, 0.0
    %s226 = sld [smem:[#allocation9 + $0xd]]
    %v227 = vstv %s226
    %v228 = vmul.f32 %v225, %v227
    %v229 = vadd.f32 %v218, %v228
    %s230 = sld [smem:[#allocation3 + $0xe]]
    %v231 = vstv %s230
    %v232 = vmul.f32 %v72, %v231
    %s233 = sld [smem:[#allocation7 + $0xe]]
    %v234 = vstv %s233
    %v235 = vadd.f32 %v232, %v234
    %v236 = vmax.f32 %v235, 0.0
    %s237 = sld [smem:[#allocation9 + $0xe]]
    %v238 = vstv %s237
    %v239 = vmul.f32 %v236, %v238
    %v240 = vadd.f32 %v229, %v239
    %s241 = sld [smem:[#allocation3 + $0xf]]
    %v242 = vstv %s241
    %v243 = vmul.f32 %v72, %v242
    %s244 = sld [smem:[#allocation7 + $0xf]]
    %v245 = vstv %s244
    %v246 = vadd.f32 %v243, %v245
    %v247 = vmax.f32 %v246, 0.0
    %s248 = sld [smem:[#allocation9 + $0xf]]
    %v249 = vstv %s248
    %v250 = vmul.f32 %v247, %v249
    %v251 = vadd.f32 %v240, %v250
    %s252 = sld [smem:[#allocation3 + $0x10]]
    %v253 = vstv %s252
    %v254 = vmul.f32 %v72, %v253
    %s255 = sld [smem:[#allocation7 + $0x10]]
    %v256 = vstv %s255
    %v257 = vadd.f32 %v254, %v256
    %v258 = vmax.f32 %v257, 0.0
    %s259 = sld [smem:[#allocation9 + $0x10]]
    %v260 = vstv %s259
    %v261 = vmul.f32 %v258, %v260
    %v262 = vadd.f32 %v251, %v261
    %s263 = sld [smem:[#allocation3 + $0x11]]
    %v264 = vstv %s263
    %v265 = vmul.f32 %v72, %v264
    %s266 = sld [smem:[#allocation7 + $0x11]]
    %v267 = vstv %s266
    %v268 = vadd.f32 %v265, %v267
    %v269 = vmax.f32 %v268, 0.0
    %s270 = sld [smem:[#allocation9 + $0x11]]
    %v271 = vstv %s270
    %v272 = vmul.f32 %v269, %v271
    %v273 = vadd.f32 %v262, %v272
    %s274 = sld [smem:[#allocation3 + $0x12]]
    %v275 = vstv %s274
    %v276 = vmul.f32 %v72, %v275
    %s277 = sld [smem:[#allocation7 + $0x12]]
    %v278 = vstv %s277
    %v279 = vadd.f32 %v276, %v278
    %v280 = vmax.f32 %v279, 0.0
    %s281 = sld [smem:[#allocation9 + $0x12]]
    %v282 = vstv %s281
    %v283 = vmul.f32 %v280, %v282
    %v284 = vadd.f32 %v273, %v283
    %s285 = sld [smem:[#allocation3 + $0x13]]
    %v286 = vstv %s285
    %v287 = vmul.f32 %v72, %v286
    %s288 = sld [smem:[#allocation7 + $0x13]]
    %v289 = vstv %s288
    %v290 = vadd.f32 %v287, %v289
    %v291 = vmax.f32 %v290, 0.0
    %s292 = sld [smem:[#allocation9 + $0x13]]
    %v293 = vstv %s292
    %v294 = vmul.f32 %v291, %v293
    %v295 = vadd.f32 %v284, %v294
    %s296 = sld [smem:[#allocation3 + $0x14]]
    %v297 = vstv %s296
    %v298 = vmul.f32 %v72, %v297
    %s299 = sld [smem:[#allocation7 + $0x14]]
    %v300 = vstv %s299
    %v301 = vadd.f32 %v298, %v300
    %v302 = vmax.f32 %v301, 0.0
    %s303 = sld [smem:[#allocation9 + $0x14]]
    %v304 = vstv %s303
    %v305 = vmul.f32 %v302, %v304
    %v306 = vadd.f32 %v295, %v305
    %s307 = sld [smem:[#allocation3 + $0x15]]
    %v308 = vstv %s307
    %v309 = vmul.f32 %v72, %v308
    %s310 = sld [smem:[#allocation7 + $0x15]]
    %v311 = vstv %s310
    %v312 = vadd.f32 %v309, %v311
    %v313 = vmax.f32 %v312, 0.0
    %s314 = sld [smem:[#allocation9 + $0x15]]
    %v315 = vstv %s314
    %v316 = vmul.f32 %v313, %v315
    %v317 = vadd.f32 %v306, %v316
    %s318 = sld [smem:[#allocation3 + $0x16]]
    %v319 = vstv %s318
    %v320 = vmul.f32 %v72, %v319
    %s321 = sld [smem:[#allocation7 + $0x16]]
    %v322 = vstv %s321
    %v323 = vadd.f32 %v320, %v322
    %v324 = vmax.f32 %v323, 0.0
    %s325 = sld [smem:[#allocation9 + $0x16]]
    %v326 = vstv %s325
    %v327 = vmul.f32 %v324, %v326
    %v328 = vadd.f32 %v317, %v327
    %s329 = sld [smem:[#allocation3 + $0x17]]
    %v330 = vstv %s329
    %v331 = vmul.f32 %v72, %v330
    %s332 = sld [smem:[#allocation7 + $0x17]]
    %v333 = vstv %s332
    %v334 = vadd.f32 %v331, %v333
    %v335 = vmax.f32 %v334, 0.0
    %s336 = sld [smem:[#allocation9 + $0x17]]
    %v337 = vstv %s336
    %v338 = vmul.f32 %v335, %v337
    %v339 = vadd.f32 %v328, %v338
    %s340 = sld [smem:[#allocation3 + $0x18]]
    %v341 = vstv %s340
    %v342 = vmul.f32 %v72, %v341
    %s343 = sld [smem:[#allocation7 + $0x18]]
    %v344 = vstv %s343
    %v345 = vadd.f32 %v342, %v344
    %v346 = vmax.f32 %v345, 0.0
    %s347 = sld [smem:[#allocation9 + $0x18]]
    %v348 = vstv %s347
    %v349 = vmul.f32 %v346, %v348
    %v350 = vadd.f32 %v339, %v349
    %s351 = sld [smem:[#allocation3 + $0x19]]
    %v352 = vstv %s351
    %v353 = vmul.f32 %v72, %v352
    %s354 = sld [smem:[#allocation7 + $0x19]]
    %v355 = vstv %s354
    %v356 = vadd.f32 %v353, %v355
    %v357 = vmax.f32 %v356, 0.0
    %s358 = sld [smem:[#allocation9 + $0x19]]
    %v359 = vstv %s358
    %v360 = vmul.f32 %v357, %v359
    %v361 = vadd.f32 %v350, %v360
    %s362 = sld [smem:[#allocation3 + $0x1a]]
    %v363 = vstv %s362
    %v364 = vmul.f32 %v72, %v363
    %s365 = sld [smem:[#allocation7 + $0x1a]]
    %v366 = vstv %s365
    %v367 = vadd.f32 %v364, %v366
    %v368 = vmax.f32 %v367, 0.0
    %s369 = sld [smem:[#allocation9 + $0x1a]]
    %v370 = vstv %s369
    %v371 = vmul.f32 %v368, %v370
    %v372 = vadd.f32 %v361, %v371
    %s373 = sld [smem:[#allocation3 + $0x1b]]
    %v374 = vstv %s373
    %v375 = vmul.f32 %v72, %v374
    %s376 = sld [smem:[#allocation7 + $0x1b]]
    %v377 = vstv %s376
    %v378 = vadd.f32 %v375, %v377
    %v379 = vmax.f32 %v378, 0.0
    %s380 = sld [smem:[#allocation9 + $0x1b]]
    %v381 = vstv %s380
    %v382 = vmul.f32 %v379, %v381
    %v383 = vadd.f32 %v372, %v382
    %s384 = sld [smem:[#allocation3 + $0x1c]]
    %v385 = vstv %s384
    %v386 = vmul.f32 %v72, %v385
    %s387 = sld [smem:[#allocation7 + $0x1c]]
    %v388 = vstv %s387
    %v389 = vadd.f32 %v386, %v388
    %v390 = vmax.f32 %v389, 0.0
    %s391 = sld [smem:[#allocation9 + $0x1c]]
    %v392 = vstv %s391
    %v393 = vmul.f32 %v390, %v392
    %v394 = vadd.f32 %v383, %v393
    %s395 = sld [smem:[#allocation3 + $0x1d]]
    %v396 = vstv %s395
    %v397 = vmul.f32 %v72, %v396
    %s398 = sld [smem:[#allocation7 + $0x1d]]
    %v399 = vstv %s398
    %v400 = vadd.f32 %v397, %v399
    %v401 = vmax.f32 %v400, 0.0
    %s402 = sld [smem:[#allocation9 + $0x1d]]
    %v403 = vstv %s402
    %v404 = vmul.f32 %v401, %v403
    %v405 = vadd.f32 %v394, %v404
    %s406 = sld [smem:[#allocation3 + $0x1e]]
    %v407 = vstv %s406
    %v408 = vmul.f32 %v72, %v407
    %s409 = sld [smem:[#allocation7 + $0x1e]]
    %v410 = vstv %s409
    %v411 = vadd.f32 %v408, %v410
    %v412 = vmax.f32 %v411, 0.0
    %s413 = sld [smem:[#allocation9 + $0x1e]]
    %v414 = vstv %s413
    %v415 = vmul.f32 %v412, %v414
    %v416 = vadd.f32 %v405, %v415
    %s417 = sld [smem:[#allocation3 + $0x1f]]
    %v418 = vstv %s417
    %v419 = vmul.f32 %v72, %v418
    %s420 = sld [smem:[#allocation7 + $0x1f]]
    %v421 = vstv %s420
    %v422 = vadd.f32 %v419, %v421
    %v423 = vmax.f32 %v422, 0.0
    %s424 = sld [smem:[#allocation9 + $0x1f]]
    %v425 = vstv %s424
    %v426 = vmul.f32 %v423, %v425
    %v427 = vadd.f32 %v416, %v426
    %s428 = sld [smem:[#allocation3 + $0x20]]
    %v429 = vstv %s428
    %v430 = vmul.f32 %v72, %v429
    %s431 = sld [smem:[#allocation7 + $0x20]]
    %v432 = vstv %s431
    %v433 = vadd.f32 %v430, %v432
    %v434 = vmax.f32 %v433, 0.0
    %s435 = sld [smem:[#allocation9 + $0x20]]
    %v436 = vstv %s435
    %v437 = vmul.f32 %v434, %v436
    %v438 = vadd.f32 %v427, %v437
    %s439 = sld [smem:[#allocation3 + $0x21]]
    %v440 = vstv %s439
    %v441 = vmul.f32 %v72, %v440
    %s442 = sld [smem:[#allocation7 + $0x21]]
    %v443 = vstv %s442
    %v444 = vadd.f32 %v441, %v443
    %v445 = vmax.f32 %v444, 0.0
    %s446 = sld [smem:[#allocation9 + $0x21]]
    %v447 = vstv %s446
    %v448 = vmul.f32 %v445, %v447
    %v449 = vadd.f32 %v438, %v448
    %s450 = sld [smem:[#allocation3 + $0x22]]
    %v451 = vstv %s450
    %v452 = vmul.f32 %v72, %v451
    %s453 = sld [smem:[#allocation7 + $0x22]]
    %v454 = vstv %s453
    %v455 = vadd.f32 %v452, %v454
    %v456 = vmax.f32 %v455, 0.0
    %s457 = sld [smem:[#allocation9 + $0x22]]
    %v458 = vstv %s457
    %v459 = vmul.f32 %v456, %v458
    %v460 = vadd.f32 %v449, %v459
    %s461 = sld [smem:[#allocation3 + $0x23]]
    %v462 = vstv %s461
    %v463 = vmul.f32 %v72, %v462
    %s464 = sld [smem:[#allocation7 + $0x23]]
    %v465 = vstv %s464
    %v466 = vadd.f32 %v463, %v465
    %v467 = vmax.f32 %v466, 0.0
    %s468 = sld [smem:[#allocation9 + $0x23]]
    %v469 = vstv %s468
    %v470 = vmul.f32 %v467, %v469
    %v471 = vadd.f32 %v460, %v470
    %s472 = sld [smem:[#allocation3 + $0x24]]
    %v473 = vstv %s472
    %v474 = vmul.f32 %v72, %v473
    %s475 = sld [smem:[#allocation7 + $0x24]]
    %v476 = vstv %s475
    %v477 = vadd.f32 %v474, %v476
    %v478 = vmax.f32 %v477, 0.0
    %s479 = sld [smem:[#allocation9 + $0x24]]
    %v480 = vstv %s479
    %v481 = vmul.f32 %v478, %v480
    %v482 = vadd.f32 %v471, %v481
    %s483 = sld [smem:[#allocation3 + $0x25]]
    %v484 = vstv %s483
    %v485 = vmul.f32 %v72, %v484
    %s486 = sld [smem:[#allocation7 + $0x25]]
    %v487 = vstv %s486
    %v488 = vadd.f32 %v485, %v487
    %v489 = vmax.f32 %v488, 0.0
    %s490 = sld [smem:[#allocation9 + $0x25]]
    %v491 = vstv %s490
    %v492 = vmul.f32 %v489, %v491
    %v493 = vadd.f32 %v482, %v492
    %s494 = sld [smem:[#allocation3 + $0x26]]
    %v495 = vstv %s494
    %v496 = vmul.f32 %v72, %v495
    %s497 = sld [smem:[#allocation7 + $0x26]]
    %v498 = vstv %s497
    %v499 = vadd.f32 %v496, %v498
    %v500 = vmax.f32 %v499, 0.0
    %s501 = sld [smem:[#allocation9 + $0x26]]
    %v502 = vstv %s501
    %v503 = vmul.f32 %v500, %v502
    %v504 = vadd.f32 %v493, %v503
    %s505 = sld [smem:[#allocation3 + $0x27]]
    %v506 = vstv %s505
    %v507 = vmul.f32 %v72, %v506
    %s508 = sld [smem:[#allocation7 + $0x27]]
    %v509 = vstv %s508
    %v510 = vadd.f32 %v507, %v509
    %v511 = vmax.f32 %v510, 0.0
    %s512 = sld [smem:[#allocation9 + $0x27]]
    %v513 = vstv %s512
    %v514 = vmul.f32 %v511, %v513
    %v515 = vadd.f32 %v504, %v514
    %s516 = sld [smem:[#allocation3 + $0x28]]
    %v517 = vstv %s516
    %v518 = vmul.f32 %v72, %v517
    %s519 = sld [smem:[#allocation7 + $0x28]]
    %v520 = vstv %s519
    %v521 = vadd.f32 %v518, %v520
    %v522 = vmax.f32 %v521, 0.0
    %s523 = sld [smem:[#allocation9 + $0x28]]
    %v524 = vstv %s523
    %v525 = vmul.f32 %v522, %v524
    %v526 = vadd.f32 %v515, %v525
    %s527 = sld [smem:[#allocation3 + $0x29]]
    %v528 = vstv %s527
    %v529 = vmul.f32 %v72, %v528
    %s530 = sld [smem:[#allocation7 + $0x29]]
    %v531 = vstv %s530
    %v532 = vadd.f32 %v529, %v531
    %v533 = vmax.f32 %v532, 0.0
    %s534 = sld [smem:[#allocation9 + $0x29]]
    %v535 = vstv %s534
    %v536 = vmul.f32 %v533, %v535
    %v537 = vadd.f32 %v526, %v536
    %s538 = sld [smem:[#allocation3 + $0x2a]]
    %v539 = vstv %s538
    %v540 = vmul.f32 %v72, %v539
    %s541 = sld [smem:[#allocation7 + $0x2a]]
    %v542 = vstv %s541
    %v543 = vadd.f32 %v540, %v542
    %v544 = vmax.f32 %v543, 0.0
    %s545 = sld [smem:[#allocation9 + $0x2a]]
    %v546 = vstv %s545
    %v547 = vmul.f32 %v544, %v546
    %v548 = vadd.f32 %v537, %v547
    %s549 = sld [smem:[#allocation3 + $0x2b]]
    %v550 = vstv %s549
    %v551 = vmul.f32 %v72, %v550
    %s552 = sld [smem:[#allocation7 + $0x2b]]
    %v553 = vstv %s552
    %v554 = vadd.f32 %v551, %v553
    %v555 = vmax.f32 %v554, 0.0
    %s556 = sld [smem:[#allocation9 + $0x2b]]
    %v557 = vstv %s556
    %v558 = vmul.f32 %v555, %v557
    %v559 = vadd.f32 %v548, %v558
    %s560 = sld [smem:[#allocation3 + $0x2c]]
    %v561 = vstv %s560
    %v562 = vmul.f32 %v72, %v561
    %s563 = sld [smem:[#allocation7 + $0x2c]]
    %v564 = vstv %s563
    %v565 = vadd.f32 %v562, %v564
    %v566 = vmax.f32 %v565, 0.0
    %s567 = sld [smem:[#allocation9 + $0x2c]]
    %v568 = vstv %s567
    %v569 = vmul.f32 %v566, %v568
    %v570 = vadd.f32 %v559, %v569
    %s571 = sld [smem:[#allocation3 + $0x2d]]
    %v572 = vstv %s571
    %v573 = vmul.f32 %v72, %v572
    %s574 = sld [smem:[#allocation7 + $0x2d]]
    %v575 = vstv %s574
    %v576 = vadd.f32 %v573, %v575
    %v577 = vmax.f32 %v576, 0.0
    %s578 = sld [smem:[#allocation9 + $0x2d]]
    %v579 = vstv %s578
    %v580 = vmul.f32 %v577, %v579
    %v581 = vadd.f32 %v570, %v580
    %s582 = sld [smem:[#allocation3 + $0x2e]]
    %v583 = vstv %s582
    %v584 = vmul.f32 %v72, %v583
    %s585 = sld [smem:[#allocation7 + $0x2e]]
    %v586 = vstv %s585
    %v587 = vadd.f32 %v584, %v586
    %v588 = vmax.f32 %v587, 0.0
    %s589 = sld [smem:[#allocation9 + $0x2e]]
    %v590 = vstv %s589
    %v591 = vmul.f32 %v588, %v590
    %v592 = vadd.f32 %v581, %v591
    %s593 = sld [smem:[#allocation3 + $0x2f]]
    %v594 = vstv %s593
    %v595 = vmul.f32 %v72, %v594
    %s596 = sld [smem:[#allocation7 + $0x2f]]
    %v597 = vstv %s596
    %v598 = vadd.f32 %v595, %v597
    %v599 = vmax.f32 %v598, 0.0
    %s600 = sld [smem:[#allocation9 + $0x2f]]
    %v601 = vstv %s600
    %v602 = vmul.f32 %v599, %v601
    %v603 = vadd.f32 %v592, %v602
    %s604 = sld [smem:[#allocation3 + $0x30]]
    %v605 = vstv %s604
    %v606 = vmul.f32 %v72, %v605
    %s607 = sld [smem:[#allocation7 + $0x30]]
    %v608 = vstv %s607
    %v609 = vadd.f32 %v606, %v608
    %v610 = vmax.f32 %v609, 0.0
    %s611 = sld [smem:[#allocation9 + $0x30]]
    %v612 = vstv %s611
    %v613 = vmul.f32 %v610, %v612
    %v614 = vadd.f32 %v603, %v613
    %s615 = sld [smem:[#allocation3 + $0x31]]
    %v616 = vstv %s615
    %v617 = vmul.f32 %v72, %v616
    %s618 = sld [smem:[#allocation7 + $0x31]]
    %v619 = vstv %s618
    %v620 = vadd.f32 %v617, %v619
    %v621 = vmax.f32 %v620, 0.0
    %s622 = sld [smem:[#allocation9 + $0x31]]
    %v623 = vstv %s622
    %v624 = vmul.f32 %v621, %v623
    %v625 = vadd.f32 %v614, %v624
    %s626 = sld [smem:[#allocation3 + $0x32]]
    %v627 = vstv %s626
    %v628 = vmul.f32 %v72, %v627
    %s629 = sld [smem:[#allocation7 + $0x32]]
    %v630 = vstv %s629
    %v631 = vadd.f32 %v628, %v630
    %v632 = vmax.f32 %v631, 0.0
    %s633 = sld [smem:[#allocation9 + $0x32]]
    %v634 = vstv %s633
    %v635 = vmul.f32 %v632, %v634
    %v636 = vadd.f32 %v625, %v635
    %s637 = sld [smem:[#allocation3 + $0x33]]
    %v638 = vstv %s637
    %v639 = vmul.f32 %v72, %v638
    %s640 = sld [smem:[#allocation7 + $0x33]]
    %v641 = vstv %s640
    %v642 = vadd.f32 %v639, %v641
    %v643 = vmax.f32 %v642, 0.0
    %s644 = sld [smem:[#allocation9 + $0x33]]
    %v645 = vstv %s644
    %v646 = vmul.f32 %v643, %v645
    %v647 = vadd.f32 %v636, %v646
    %s648 = sld [smem:[#allocation3 + $0x34]]
    %v649 = vstv %s648
    %v650 = vmul.f32 %v72, %v649
    %s651 = sld [smem:[#allocation7 + $0x34]]
    %v652 = vstv %s651
    %v653 = vadd.f32 %v650, %v652
    %v654 = vmax.f32 %v653, 0.0
    %s655 = sld [smem:[#allocation9 + $0x34]]
    %v656 = vstv %s655
    %v657 = vmul.f32 %v654, %v656
    %v658 = vadd.f32 %v647, %v657
    %s659 = sld [smem:[#allocation3 + $0x35]]
    %v660 = vstv %s659
    %v661 = vmul.f32 %v72, %v660
    %s662 = sld [smem:[#allocation7 + $0x35]]
    %v663 = vstv %s662
    %v664 = vadd.f32 %v661, %v663
    %v665 = vmax.f32 %v664, 0.0
    %s666 = sld [smem:[#allocation9 + $0x35]]
    %v667 = vstv %s666
    %v668 = vmul.f32 %v665, %v667
    %v669 = vadd.f32 %v658, %v668
    %s670 = sld [smem:[#allocation3 + $0x36]]
    %v671 = vstv %s670
    %v672 = vmul.f32 %v72, %v671
    %s673 = sld [smem:[#allocation7 + $0x36]]
    %v674 = vstv %s673
    %v675 = vadd.f32 %v672, %v674
    %v676 = vmax.f32 %v675, 0.0
    %s677 = sld [smem:[#allocation9 + $0x36]]
    %v678 = vstv %s677
    %v679 = vmul.f32 %v676, %v678
    %v680 = vadd.f32 %v669, %v679
    %s681 = sld [smem:[#allocation3 + $0x37]]
    %v682 = vstv %s681
    %v683 = vmul.f32 %v72, %v682
    %s684 = sld [smem:[#allocation7 + $0x37]]
    %v685 = vstv %s684
    %v686 = vadd.f32 %v683, %v685
    %v687 = vmax.f32 %v686, 0.0
    %s688 = sld [smem:[#allocation9 + $0x37]]
    %v689 = vstv %s688
    %v690 = vmul.f32 %v687, %v689
    %v691 = vadd.f32 %v680, %v690
    %s692 = sld [smem:[#allocation3 + $0x38]]
    %v693 = vstv %s692
    %v694 = vmul.f32 %v72, %v693
    %s695 = sld [smem:[#allocation7 + $0x38]]
    %v696 = vstv %s695
    %v697 = vadd.f32 %v694, %v696
    %v698 = vmax.f32 %v697, 0.0
    %s699 = sld [smem:[#allocation9 + $0x38]]
    %v700 = vstv %s699
    %v701 = vmul.f32 %v698, %v700
    %v702 = vadd.f32 %v691, %v701
    %s703 = sld [smem:[#allocation3 + $0x39]]
    %v704 = vstv %s703
    %v705 = vmul.f32 %v72, %v704
    %s706 = sld [smem:[#allocation7 + $0x39]]
    %v707 = vstv %s706
    %v708 = vadd.f32 %v705, %v707
    %v709 = vmax.f32 %v708, 0.0
    %s710 = sld [smem:[#allocation9 + $0x39]]
    %v711 = vstv %s710
    %v712 = vmul.f32 %v709, %v711
    %v713 = vadd.f32 %v702, %v712
    %s714 = sld [smem:[#allocation3 + $0x3a]]
    %v715 = vstv %s714
    %v716 = vmul.f32 %v72, %v715
    %s717 = sld [smem:[#allocation7 + $0x3a]]
    %v718 = vstv %s717
    %v719 = vadd.f32 %v716, %v718
    %v720 = vmax.f32 %v719, 0.0
    %s721 = sld [smem:[#allocation9 + $0x3a]]
    %v722 = vstv %s721
    %v723 = vmul.f32 %v720, %v722
    %v724 = vadd.f32 %v713, %v723
    %s725 = sld [smem:[#allocation3 + $0x3b]]
    %v726 = vstv %s725
    %v727 = vmul.f32 %v72, %v726
    %s728 = sld [smem:[#allocation7 + $0x3b]]
    %v729 = vstv %s728
    %v730 = vadd.f32 %v727, %v729
    %v731 = vmax.f32 %v730, 0.0
    %s732 = sld [smem:[#allocation9 + $0x3b]]
    %v733 = vstv %s732
    %v734 = vmul.f32 %v731, %v733
    %v735 = vadd.f32 %v724, %v734
    %s736 = sld [smem:[#allocation3 + $0x3c]]
    %v737 = vstv %s736
    %v738 = vmul.f32 %v72, %v737
    %s739 = sld [smem:[#allocation7 + $0x3c]]
    %v740 = vstv %s739
    %v741 = vadd.f32 %v738, %v740
    %v742 = vmax.f32 %v741, 0.0
    %s743 = sld [smem:[#allocation9 + $0x3c]]
    %v744 = vstv %s743
    %v745 = vmul.f32 %v742, %v744
    %v746 = vadd.f32 %v735, %v745
    %s747 = sld [smem:[#allocation3 + $0x3d]]
    %v748 = vstv %s747
    %v749 = vmul.f32 %v72, %v748
    %s750 = sld [smem:[#allocation7 + $0x3d]]
    %v751 = vstv %s750
    %v752 = vadd.f32 %v749, %v751
    %v753 = vmax.f32 %v752, 0.0
    %s754 = sld [smem:[#allocation9 + $0x3d]]
    %v755 = vstv %s754
    %v756 = vmul.f32 %v753, %v755
    %v757 = vadd.f32 %v746, %v756
    %s758 = sld [smem:[#allocation3 + $0x3e]]
    %v759 = vstv %s758
    %v760 = vmul.f32 %v72, %v759
    %s761 = sld [smem:[#allocation7 + $0x3e]]
    %v762 = vstv %s761
    %v763 = vadd.f32 %v760, %v762
    %v764 = vmax.f32 %v763, 0.0
    %s765 = sld [smem:[#allocation9 + $0x3e]]
    %v766 = vstv %s765
    %v767 = vmul.f32 %v764, %v766
    %v768 = vadd.f32 %v757, %v767
    %s769 = sld [smem:[#allocation3 + $0x3f]]
    %v770 = vstv %s769
    %v771 = vmul.f32 %v72, %v770
    %s772 = sld [smem:[#allocation7 + $0x3f]]
    %v773 = vstv %s772
    %v774 = vadd.f32 %v771, %v773
    %v775 = vmax.f32 %v774, 0.0
    %s776 = sld [smem:[#allocation9 + $0x3f]]
    %v777 = vstv %s776
    %v778 = vmul.f32 %v775, %v777
    %v779 = vadd.f32 %v768, %v778
    %s780 = sld [smem:[#allocation3 + $0x40]]
    %v781 = vstv %s780
    %v782 = vmul.f32 %v72, %v781
    %s783 = sld [smem:[#allocation7 + $0x40]]
    %v784 = vstv %s783
    %v785 = vadd.f32 %v782, %v784
    %v786 = vmax.f32 %v785, 0.0
    %s787 = sld [smem:[#allocation9 + $0x40]]
    %v788 = vstv %s787
    %v789 = vmul.f32 %v786, %v788
    %v790 = vadd.f32 %v779, %v789
    %s791 = sld [smem:[#allocation3 + $0x41]]
    %v792 = vstv %s791
    %v793 = vmul.f32 %v72, %v792
    %s794 = sld [smem:[#allocation7 + $0x41]]
    %v795 = vstv %s794
    %v796 = vadd.f32 %v793, %v795
    %v797 = vmax.f32 %v796, 0.0
    %s798 = sld [smem:[#allocation9 + $0x41]]
    %v799 = vstv %s798
    %v800 = vmul.f32 %v797, %v799
    %v801 = vadd.f32 %v790, %v800
    %s802 = sld [smem:[#allocation3 + $0x42]]
    %v803 = vstv %s802
    %v804 = vmul.f32 %v72, %v803
    %s805 = sld [smem:[#allocation7 + $0x42]]
    %v806 = vstv %s805
    %v807 = vadd.f32 %v804, %v806
    %v808 = vmax.f32 %v807, 0.0
    %s809 = sld [smem:[#allocation9 + $0x42]]
    %v810 = vstv %s809
    %v811 = vmul.f32 %v808, %v810
    %v812 = vadd.f32 %v801, %v811
    %s813 = sld [smem:[#allocation3 + $0x43]]
    %v814 = vstv %s813
    %v815 = vmul.f32 %v72, %v814
    %s816 = sld [smem:[#allocation7 + $0x43]]
    %v817 = vstv %s816
    %v818 = vadd.f32 %v815, %v817
    %v819 = vmax.f32 %v818, 0.0
    %s820 = sld [smem:[#allocation9 + $0x43]]
    %v821 = vstv %s820
    %v822 = vmul.f32 %v819, %v821
    %v823 = vadd.f32 %v812, %v822
    %s824 = sld [smem:[#allocation3 + $0x44]]
    %v825 = vstv %s824
    %v826 = vmul.f32 %v72, %v825
    %s827 = sld [smem:[#allocation7 + $0x44]]
    %v828 = vstv %s827
    %v829 = vadd.f32 %v826, %v828
    %v830 = vmax.f32 %v829, 0.0
    %s831 = sld [smem:[#allocation9 + $0x44]]
    %v832 = vstv %s831
    %v833 = vmul.f32 %v830, %v832
    %v834 = vadd.f32 %v823, %v833
    %s835 = sld [smem:[#allocation3 + $0x45]]
    %v836 = vstv %s835
    %v837 = vmul.f32 %v72, %v836
    %s838 = sld [smem:[#allocation7 + $0x45]]
    %v839 = vstv %s838
    %v840 = vadd.f32 %v837, %v839
    %v841 = vmax.f32 %v840, 0.0
    %s842 = sld [smem:[#allocation9 + $0x45]]
    %v843 = vstv %s842
    %v844 = vmul.f32 %v841, %v843
    %v845 = vadd.f32 %v834, %v844
    %s846 = sld [smem:[#allocation3 + $0x46]]
    %v847 = vstv %s846
    %v848 = vmul.f32 %v72, %v847
    %s849 = sld [smem:[#allocation7 + $0x46]]
    %v850 = vstv %s849
    %v851 = vadd.f32 %v848, %v850
    %v852 = vmax.f32 %v851, 0.0
    %s853 = sld [smem:[#allocation9 + $0x46]]
    %v854 = vstv %s853
    %v855 = vmul.f32 %v852, %v854
    %v856 = vadd.f32 %v845, %v855
    %s857 = sld [smem:[#allocation3 + $0x47]]
    %v858 = vstv %s857
    %v859 = vmul.f32 %v72, %v858
    %s860 = sld [smem:[#allocation7 + $0x47]]
    %v861 = vstv %s860
    %v862 = vadd.f32 %v859, %v861
    %v863 = vmax.f32 %v862, 0.0
    %s864 = sld [smem:[#allocation9 + $0x47]]
    %v865 = vstv %s864
    %v866 = vmul.f32 %v863, %v865
    %v867 = vadd.f32 %v856, %v866
    %s868 = sld [smem:[#allocation3 + $0x48]]
    %v869 = vstv %s868
    %v870 = vmul.f32 %v72, %v869
    %s871 = sld [smem:[#allocation7 + $0x48]]
    %v872 = vstv %s871
    %v873 = vadd.f32 %v870, %v872
    %v874 = vmax.f32 %v873, 0.0
    %s875 = sld [smem:[#allocation9 + $0x48]]
    %v876 = vstv %s875
    %v877 = vmul.f32 %v874, %v876
    %v878 = vadd.f32 %v867, %v877
    %s879 = sld [smem:[#allocation3 + $0x49]]
    %v880 = vstv %s879
    %v881 = vmul.f32 %v72, %v880
    %s882 = sld [smem:[#allocation7 + $0x49]]
    %v883 = vstv %s882
    %v884 = vadd.f32 %v881, %v883
    %v885 = vmax.f32 %v884, 0.0
    %s886 = sld [smem:[#allocation9 + $0x49]]
    %v887 = vstv %s886
    %v888 = vmul.f32 %v885, %v887
    %v889 = vadd.f32 %v878, %v888
    %s890 = sld [smem:[#allocation3 + $0x4a]]
    %v891 = vstv %s890
    %v892 = vmul.f32 %v72, %v891
    %s893 = sld [smem:[#allocation7 + $0x4a]]
    %v894 = vstv %s893
    %v895 = vadd.f32 %v892, %v894
    %v896 = vmax.f32 %v895, 0.0
    %s897 = sld [smem:[#allocation9 + $0x4a]]
    %v898 = vstv %s897
    %v899 = vmul.f32 %v896, %v898
    %v900 = vadd.f32 %v889, %v899
    %s901 = sld [smem:[#allocation3 + $0x4b]]
    %v902 = vstv %s901
    %v903 = vmul.f32 %v72, %v902
    %s904 = sld [smem:[#allocation7 + $0x4b]]
    %v905 = vstv %s904
    %v906 = vadd.f32 %v903, %v905
    %v907 = vmax.f32 %v906, 0.0
    %s908 = sld [smem:[#allocation9 + $0x4b]]
    %v909 = vstv %s908
    %v910 = vmul.f32 %v907, %v909
    %v911 = vadd.f32 %v900, %v910
    %s912 = sld [smem:[#allocation3 + $0x4c]]
    %v913 = vstv %s912
    %v914 = vmul.f32 %v72, %v913
    %s915 = sld [smem:[#allocation7 + $0x4c]]
    %v916 = vstv %s915
    %v917 = vadd.f32 %v914, %v916
    %v918 = vmax.f32 %v917, 0.0
    %s919 = sld [smem:[#allocation9 + $0x4c]]
    %v920 = vstv %s919
    %v921 = vmul.f32 %v918, %v920
    %v922 = vadd.f32 %v911, %v921
    %s923 = sld [smem:[#allocation3 + $0x4d]]
    %v924 = vstv %s923
    %v925 = vmul.f32 %v72, %v924
    %s926 = sld [smem:[#allocation7 + $0x4d]]
    %v927 = vstv %s926
    %v928 = vadd.f32 %v925, %v927
    %v929 = vmax.f32 %v928, 0.0
    %s930 = sld [smem:[#allocation9 + $0x4d]]
    %v931 = vstv %s930
    %v932 = vmul.f32 %v929, %v931
    %v933 = vadd.f32 %v922, %v932
    %s934 = sld [smem:[#allocation3 + $0x4e]]
    %v935 = vstv %s934
    %v936 = vmul.f32 %v72, %v935
    %s937 = sld [smem:[#allocation7 + $0x4e]]
    %v938 = vstv %s937
    %v939 = vadd.f32 %v936, %v938
    %v940 = vmax.f32 %v939, 0.0
    %s941 = sld [smem:[#allocation9 + $0x4e]]
    %v942 = vstv %s941
    %v943 = vmul.f32 %v940, %v942
    %v944 = vadd.f32 %v933, %v943
    %s945 = sld [smem:[#allocation3 + $0x4f]]
    %v946 = vstv %s945
    %v947 = vmul.f32 %v72, %v946
    %s948 = sld [smem:[#allocation7 + $0x4f]]
    %v949 = vstv %s948
    %v950 = vadd.f32 %v947, %v949
    %v951 = vmax.f32 %v950, 0.0
    %s952 = sld [smem:[#allocation9 + $0x4f]]
    %v953 = vstv %s952
    %v954 = vmul.f32 %v951, %v953
    %v955 = vadd.f32 %v944, %v954
    %s956 = sld [smem:[#allocation3 + $0x50]]
    %v957 = vstv %s956
    %v958 = vmul.f32 %v72, %v957
    %s959 = sld [smem:[#allocation7 + $0x50]]
    %v960 = vstv %s959
    %v961 = vadd.f32 %v958, %v960
    %v962 = vmax.f32 %v961, 0.0
    %s963 = sld [smem:[#allocation9 + $0x50]]
    %v964 = vstv %s963
    %v965 = vmul.f32 %v962, %v964
    %v966 = vadd.f32 %v955, %v965
    %s967 = sld [smem:[#allocation3 + $0x51]]
    %v968 = vstv %s967
    %v969 = vmul.f32 %v72, %v968
    %s970 = sld [smem:[#allocation7 + $0x51]]
    %v971 = vstv %s970
    %v972 = vadd.f32 %v969, %v971
    %v973 = vmax.f32 %v972, 0.0
    %s974 = sld [smem:[#allocation9 + $0x51]]
    %v975 = vstv %s974
    %v976 = vmul.f32 %v973, %v975
    %v977 = vadd.f32 %v966, %v976
    %s978 = sld [smem:[#allocation3 + $0x52]]
    %v979 = vstv %s978
    %v980 = vmul.f32 %v72, %v979
    %s981 = sld [smem:[#allocation7 + $0x52]]
    %v982 = vstv %s981
    %v983 = vadd.f32 %v980, %v982
    %v984 = vmax.f32 %v983, 0.0
    %s985 = sld [smem:[#allocation9 + $0x52]]
    %v986 = vstv %s985
    %v987 = vmul.f32 %v984, %v986
    %v988 = vadd.f32 %v977, %v987
    %s989 = sld [smem:[#allocation3 + $0x53]]
    %v990 = vstv %s989
    %v991 = vmul.f32 %v72, %v990
    %s992 = sld [smem:[#allocation7 + $0x53]]
    %v993 = vstv %s992
    %v994 = vadd.f32 %v991, %v993
    %v995 = vmax.f32 %v994, 0.0
    %s996 = sld [smem:[#allocation9 + $0x53]]
    %v997 = vstv %s996
    %v998 = vmul.f32 %v995, %v997
    %v999 = vadd.f32 %v988, %v998
    %s1000 = sld [smem:[#allocation3 + $0x54]]
    %v1001 = vstv %s1000
    %v1002 = vmul.f32 %v72, %v1001
    %s1003 = sld [smem:[#allocation7 + $0x54]]
    %v1004 = vstv %s1003
    %v1005 = vadd.f32 %v1002, %v1004
    %v1006 = vmax.f32 %v1005, 0.0
    %s1007 = sld [smem:[#allocation9 + $0x54]]
    %v1008 = vstv %s1007
    %v1009 = vmul.f32 %v1006, %v1008
    %v1010 = vadd.f32 %v999, %v1009
    %s1011 = sld [smem:[#allocation3 + $0x55]]
    %v1012 = vstv %s1011
    %v1013 = vmul.f32 %v72, %v1012
    %s1014 = sld [smem:[#allocation7 + $0x55]]
    %v1015 = vstv %s1014
    %v1016 = vadd.f32 %v1013, %v1015
    %v1017 = vmax.f32 %v1016, 0.0
    %s1018 = sld [smem:[#allocation9 + $0x55]]
    %v1019 = vstv %s1018
    %v1020 = vmul.f32 %v1017, %v1019
    %v1021 = vadd.f32 %v1010, %v1020
    %s1022 = sld [smem:[#allocation3 + $0x56]]
    %v1023 = vstv %s1022
    %v1024 = vmul.f32 %v72, %v1023
    %s1025 = sld [smem:[#allocation7 + $0x56]]
    %v1026 = vstv %s1025
    %v1027 = vadd.f32 %v1024, %v1026
    %v1028 = vmax.f32 %v1027, 0.0
    %s1029 = sld [smem:[#allocation9 + $0x56]]
    %v1030 = vstv %s1029
    %v1031 = vmul.f32 %v1028, %v1030
    %v1032 = vadd.f32 %v1021, %v1031
    %s1033 = sld [smem:[#allocation3 + $0x57]]
    %v1034 = vstv %s1033
    %v1035 = vmul.f32 %v72, %v1034
    %s1036 = sld [smem:[#allocation7 + $0x57]]
    %v1037 = vstv %s1036
    %v1038 = vadd.f32 %v1035, %v1037
    %v1039 = vmax.f32 %v1038, 0.0
    %s1040 = sld [smem:[#allocation9 + $0x57]]
    %v1041 = vstv %s1040
    %v1042 = vmul.f32 %v1039, %v1041
    %v1043 = vadd.f32 %v1032, %v1042
    %s1044 = sld [smem:[#allocation3 + $0x58]]
    %v1045 = vstv %s1044
    %v1046 = vmul.f32 %v72, %v1045
    %s1047 = sld [smem:[#allocation7 + $0x58]]
    %v1048 = vstv %s1047
    %v1049 = vadd.f32 %v1046, %v1048
    %v1050 = vmax.f32 %v1049, 0.0
    %s1051 = sld [smem:[#allocation9 + $0x58]]
    %v1052 = vstv %s1051
    %v1053 = vmul.f32 %v1050, %v1052
    %v1054 = vadd.f32 %v1043, %v1053
    %s1055 = sld [smem:[#allocation3 + $0x59]]
    %v1056 = vstv %s1055
    %v1057 = vmul.f32 %v72, %v1056
    %s1058 = sld [smem:[#allocation7 + $0x59]]
    %v1059 = vstv %s1058
    %v1060 = vadd.f32 %v1057, %v1059
    %v1061 = vmax.f32 %v1060, 0.0
    %s1062 = sld [smem:[#allocation9 + $0x59]]
    %v1063 = vstv %s1062
    %v1064 = vmul.f32 %v1061, %v1063
    %v1065 = vadd.f32 %v1054, %v1064
    %s1066 = sld [smem:[#allocation3 + $0x5a]]
    %v1067 = vstv %s1066
    %v1068 = vmul.f32 %v72, %v1067
    %s1069 = sld [smem:[#allocation7 + $0x5a]]
    %v1070 = vstv %s1069
    %v1071 = vadd.f32 %v1068, %v1070
    %v1072 = vmax.f32 %v1071, 0.0
    %s1073 = sld [smem:[#allocation9 + $0x5a]]
    %v1074 = vstv %s1073
    %v1075 = vmul.f32 %v1072, %v1074
    %v1076 = vadd.f32 %v1065, %v1075
    %s1077 = sld [smem:[#allocation3 + $0x5b]]
    %v1078 = vstv %s1077
    %v1079 = vmul.f32 %v72, %v1078
    %s1080 = sld [smem:[#allocation7 + $0x5b]]
    %v1081 = vstv %s1080
    %v1082 = vadd.f32 %v1079, %v1081
    %v1083 = vmax.f32 %v1082, 0.0
    %s1084 = sld [smem:[#allocation9 + $0x5b]]
    %v1085 = vstv %s1084
    %v1086 = vmul.f32 %v1083, %v1085
    %v1087 = vadd.f32 %v1076, %v1086
    %s1088 = sld [smem:[#allocation3 + $0x5c]]
    %v1089 = vstv %s1088
    %v1090 = vmul.f32 %v72, %v1089
    %s1091 = sld [smem:[#allocation7 + $0x5c]]
    %v1092 = vstv %s1091
    %v1093 = vadd.f32 %v1090, %v1092
    %v1094 = vmax.f32 %v1093, 0.0
    %s1095 = sld [smem:[#allocation9 + $0x5c]]
    %v1096 = vstv %s1095
    %v1097 = vmul.f32 %v1094, %v1096
    %v1098 = vadd.f32 %v1087, %v1097
    %s1099 = sld [smem:[#allocation3 + $0x5d]]
    %v1100 = vstv %s1099
    %v1101 = vmul.f32 %v72, %v1100
    %s1102 = sld [smem:[#allocation7 + $0x5d]]
    %v1103 = vstv %s1102
    %v1104 = vadd.f32 %v1101, %v1103
    %v1105 = vmax.f32 %v1104, 0.0
    %s1106 = sld [smem:[#allocation9 + $0x5d]]
    %v1107 = vstv %s1106
    %v1108 = vmul.f32 %v1105, %v1107
    %v1109 = vadd.f32 %v1098, %v1108
    %s1110 = sld [smem:[#allocation3 + $0x5e]]
    %v1111 = vstv %s1110
    %v1112 = vmul.f32 %v72, %v1111
    %s1113 = sld [smem:[#allocation7 + $0x5e]]
    %v1114 = vstv %s1113
    %v1115 = vadd.f32 %v1112, %v1114
    %v1116 = vmax.f32 %v1115, 0.0
    %s1117 = sld [smem:[#allocation9 + $0x5e]]
    %v1118 = vstv %s1117
    %v1119 = vmul.f32 %v1116, %v1118
    %v1120 = vadd.f32 %v1109, %v1119
    %s1121 = sld [smem:[#allocation3 + $0x5f]]
    %v1122 = vstv %s1121
    %v1123 = vmul.f32 %v72, %v1122
    %s1124 = sld [smem:[#allocation7 + $0x5f]]
    %v1125 = vstv %s1124
    %v1126 = vadd.f32 %v1123, %v1125
    %v1127 = vmax.f32 %v1126, 0.0
    %s1128 = sld [smem:[#allocation9 + $0x5f]]
    %v1129 = vstv %s1128
    %v1130 = vmul.f32 %v1127, %v1129
    %v1131 = vadd.f32 %v1120, %v1130
    %s1132 = sld [smem:[#allocation3 + $0x60]]
    %v1133 = vstv %s1132
    %v1134 = vmul.f32 %v72, %v1133
    %s1135 = sld [smem:[#allocation7 + $0x60]]
    %v1136 = vstv %s1135
    %v1137 = vadd.f32 %v1134, %v1136
    %v1138 = vmax.f32 %v1137, 0.0
    %s1139 = sld [smem:[#allocation9 + $0x60]]
    %v1140 = vstv %s1139
    %v1141 = vmul.f32 %v1138, %v1140
    %v1142 = vadd.f32 %v1131, %v1141
    %s1143 = sld [smem:[#allocation3 + $0x61]]
    %v1144 = vstv %s1143
    %v1145 = vmul.f32 %v72, %v1144
    %s1146 = sld [smem:[#allocation7 + $0x61]]
    %v1147 = vstv %s1146
    %v1148 = vadd.f32 %v1145, %v1147
    %v1149 = vmax.f32 %v1148, 0.0
    %s1150 = sld [smem:[#allocation9 + $0x61]]
    %v1151 = vstv %s1150
    %v1152 = vmul.f32 %v1149, %v1151
    %v1153 = vadd.f32 %v1142, %v1152
    %s1154 = sld [smem:[#allocation3 + $0x62]]
    %v1155 = vstv %s1154
    %v1156 = vmul.f32 %v72, %v1155
    %s1157 = sld [smem:[#allocation7 + $0x62]]
    %v1158 = vstv %s1157
    %v1159 = vadd.f32 %v1156, %v1158
    %v1160 = vmax.f32 %v1159, 0.0
    %s1161 = sld [smem:[#allocation9 + $0x62]]
    %v1162 = vstv %s1161
    %v1163 = vmul.f32 %v1160, %v1162
    %v1164 = vadd.f32 %v1153, %v1163
    %s1165 = sld [smem:[#allocation3 + $0x63]]
    %v1166 = vstv %s1165
    %v1167 = vmul.f32 %v72, %v1166
    %s1168 = sld [smem:[#allocation7 + $0x63]]
    %v1169 = vstv %s1168
    %v1170 = vadd.f32 %v1167, %v1169
    %v1171 = vmax.f32 %v1170, 0.0
    %s1172 = sld [smem:[#allocation9 + $0x63]]
    %v1173 = vstv %s1172
    %v1174 = vmul.f32 %v1171, %v1173
    %v1175 = vadd.f32 %v1164, %v1174
    %v1176 = vxor.u32 %v1175, 2147483648
    %v1177 = vmul.f32 %v1176, 1.442695
    %v1178 = vpow.pop %v1177
    %v1179 = vadd.f32 %v1178, 1.0
    %v1180 = vrcp.pop %v1179
    %v1181 = vmul.f32 %v1179, %v1180
    %v1182 = vsub.f32 1.0, %v1181
    %v1183 = vmul.f32 %v1180, %v1182
    %v1184 = vadd.f32 %v1180, %v1183
    %vm1185 = vweird.f32 %v1179
    %vm1186 = vweird.f32 %v1180
    %vm1187 = vmor %vm1185, %vm1186
    %v1188 = vsel %vm1187, %v1180, %v1184
    %v1189 = vand.u32 2147483647, %v1179
    %vm1190 = vcmp.eq.f32.partialorder %v1189, 8.507059e+37
    %v1191 = vand.u32 %v1179, 2147483648
    %v1192 = vor.u32 1.1754944e-38, %v1191
    %v1193 = vsel %vm1190, %v1192, %v1188
    %v1194 = vmul.f32 1.0, %v1193
    %1195 = vst [vmem:[#allocation11] sm:$0xff] %v1194
    // Predicated region
    $region38: #{tpu_custom_call.1} parent=1 // pred_check
      _
    $region39: #{tpu_custom_call.1} parent=1 // pred_check_branch
      %1197 = sbr.rel (0) target = $region41
    $region40: #{tpu_custom_call.1} parent=1 // pred_region
      %1199 = vsyncadd [#allocation5], 0
      %s1201 = sshll.u32 [#allocation11], 4
      %s1202 = int_to_ptr.vmem [resolvable:$true] %s1201
      %s1203 = sshll.u32 %s5, 4
      %s1204 = int_to_ptr.hbm [resolvable:$true] %s1203
      %1206 = dma.vmem_to_hbm [thread:$0]  %s1202, 128, %s1204, [#allocation5]
    $region41: #{tpu_custom_call.1} parent=1 // pred_fallthru
      _
    // Predicated region
    $region42: #{tpu_custom_call.1} parent=1 // pred_check
      _
    $region43: #{tpu_custom_call.1} parent=1 // pred_check_branch
      %1208 = sbr.rel (0) target = $region45
    $region44: #{tpu_custom_call.1} parent=1 // pred_region
      %1210 = dma.done [#allocation5], 128
    $region45: #{tpu_custom_call.1} parent=1 // pred_fallthru
      _
    %1211 = vsyncpa [#allocation4], 1
    %1212 = vsyncpa [#allocation5], 1
    %1213 = vsyncpa [#allocation6], 1
    %1214 = vsyncpa [#allocation8], 1

</llo_original>
